<compile_context>
chip_gen: v6e
topology: v6e:2x2x1
jax: 0.10.0
libtpu: 0.0.40
codegen_flags: <defaults>
</compile_context>

<pallas_src>
import functools

import jax
import jax.numpy as jnp
from jax import lax
from jax.experimental import pallas as pl
from jax.experimental.pallas import tpu as pltpu


# ----------------------------------------------------------------------------
# Fused Pallas kernel: CNN feature extractor + 2-layer LSTM + FC head.
# ----------------------------------------------------------------------------
def _cnn_lstm_kernel(x_ref,
                     w1_ref, b1_ref, w2_ref, b2_ref,
                     wih1_ref, whh1_ref, bl1_ref,
                     wih2_ref, whh2_ref, bl2_ref,
                     wfc1_ref, bfc1_ref, wfc2_ref, bfc2_ref,
                     out_ref, gx1_ref, *, Bt, T, H):
    f32 = jnp.float32
    bf16 = jnp.bfloat16

    def mmb(a, b):                         # both operands already bf16, f32 accumulate
        return jnp.dot(a, b, preferred_element_type=f32)

    def mm(a, b):                          # f32 activation x bf16 weight
        return mmb(a.astype(bf16), b)

    # Conv1d(k=3, pad=1) + bias + ReLU: 3 accumulating matmuls over time-shifted
    # row blocks (rows are time-major: row t*Bt + b).
    def conv3_relu(x2, w_ref, b_ref):
        R, Ci = x2.shape
        z = jnp.zeros((Bt, Ci), f32)
        x_prev = jnp.concatenate([z, x2[:R - Bt, :]], axis=0)     # x[t-1] (zero @ t=0)
        x_next = jnp.concatenate([x2[Bt:, :], z], axis=0)         # x[t+1] (zero @ t=Lc-1)
        acc = mm(x_prev, w_ref[0]) + mm(x2, w_ref[1]) + mm(x_next, w_ref[2])
        return jnp.maximum(acc + b_ref[...], 0.0)                 # f32

    # MaxPool1d(2) over time: pair rows (2s, 2s+1) -> elementwise max (VPU only).
    def maxpool2(h2):
        R, C = h2.shape
        h3 = h2.reshape(R // (2 * Bt), 2 * Bt, C)
        return jnp.maximum(h3[:, :Bt, :], h3[:, Bt:, :]).reshape(R // 2, C)

    h = conv3_relu(x_ref[...], w1_ref, b1_ref)      # (L*Bt,    C1)
    h = maxpool2(h)                                 # (L/2*Bt,  C1)
    h = conv3_relu(h, w2_ref, b2_ref)               # (L/2*Bt,  C2)
    feats = maxpool2(h)                             # (T*Bt,    C2)

    # ---- 2-layer LSTM (batch_first, eval mode) -------------------------------
    # Layer-1 input contributions for all T steps in one lane-dense (4H=128) matmul,
    # staged in VMEM scratch so the time loop reads one (Bt, 4H) slab per step.
    gx1_ref[...] = mm(feats, wih1_ref[...]) + bl1_ref[...]        # (T*Bt, 4H)

    whh1 = whh1_ref[...]
    wih2 = wih2_ref[...]
    whh2 = whh2_ref[...]
    bl2b = jnp.broadcast_to(bl2_ref[...], (Bt, 4 * H))            # hoisted broadcast

    def sigm(v):                                    # 1 EUP op/elem instead of exp+recip
        return 0.5 * (jnp.tanh(0.5 * v) + 1.0)

    def cell(g, c_prev):                            # PyTorch gate order i, f, g, o
        i = sigm(g[:, 0:H])
        f = sigm(g[:, H:2 * H])
        gg = jnp.tanh(g[:, 2 * H:3 * H])
        o = sigm(g[:, 3 * H:4 * H])
        c = f * c_prev + i * gg
        return o * jnp.tanh(c), c

    h1 = jnp.zeros((Bt, H), f32)
    c1 = jnp.zeros((Bt, H), f32)
    h2 = jnp.zeros((Bt, H), f32)
    c2 = jnp.zeros((Bt, H), f32)
    for t in range(T):                              # short static unroll (T is small)
        g1 = gx1_ref[t * Bt:(t + 1) * Bt, :] + mm(h1, whh1)
        h1, c1 = cell(g1, c1)
        g2 = mm(h1, wih2) + mm(h2, whh2) + bl2b
        h2, c2 = cell(g2, c2)

    # ---- FC head on the last timestep (dropout = identity in eval) -----------
    y = jnp.maximum(mm(h2, wfc1_ref[...]) + bfc1_ref[...], 0.0)
    out_ref[...] = mm(y, wfc2_ref[...]) + bfc2_ref[...]


# ----------------------------------------------------------------------------
# Wrapper
# ----------------------------------------------------------------------------
def cnn_lstm_forward(x, params, *, batch_tile=None):
    """x: (B, L, C_in) float32, i.e. (batch, sequence, channels) as fed to CNN_LSTMI."""
    B, L, C_in = x.shape
    assert L % 4 == 0, "sequence length must survive two MaxPool1d(2) stages"

    if batch_tile is None:
        Bt = 128 if (B > 128 and B % 128 == 0) else B   # >=2 grid steps on big batches
    else:
        Bt = batch_tile
    assert B % Bt == 0 and (Bt == B or Bt % 8 == 0)
    G = B // Bt

    C1 = params["conv1_w"].shape[0]
    C2 = params["conv2_w"].shape[0]
    H = params["weight_hh_l0"].shape[1]
    F1 = params["fc1_w"].shape[0]
    num_classes = params["fc2_w"].shape[0]
    T = L // 4

    bf16, f32 = jnp.bfloat16, jnp.float32

    # ---- one-time parameter re-layout (tiny); MXU operands -> bf16 ------------
    w1 = jnp.transpose(params["conv1_w"], (2, 1, 0)).astype(bf16)     # (3, C_in, C1)
    w2 = jnp.transpose(params["conv2_w"], (2, 1, 0)).astype(bf16)     # (3, C1,  C2)
    b1 = params["conv1_b"].reshape(1, C1).astype(f32)
    b2 = params["conv2_b"].reshape(1, C2).astype(f32)
    wih1 = params["weight_ih_l0"].T.astype(bf16)                      # (C2, 4H)
    whh1 = params["weight_hh_l0"].T.astype(bf16)                      # (H,  4H)
    bl1 = (params["bias_ih_l0"] + params["bias_hh_l0"]).reshape(1, 4 * H).astype(f32)
    wih2 = params["weight_ih_l1"].T.astype(bf16)                      # (H,  4H)
    whh2 = params["weight_hh_l1"].T.astype(bf16)                      # (H,  4H)
    bl2 = (params["bias_ih_l1"] + params["bias_hh_l1"]).reshape(1, 4 * H).astype(f32)
    wfc1 = params["fc1_w"].T.astype(bf16)                             # (H,  F1)
    bfc1 = params["fc1_b"].reshape(1, F1).astype(f32)
    wfc2 = params["fc2_w"].T.astype(bf16)                             # (F1, nc)
    bfc2 = params["fc2_b"].reshape(1, num_classes).astype(f32)

    # Time-major rows per batch tile: row g*L*Bt + t*Bt + b.  One cheap XLA
    # transpose of the small input replaces the old in-kernel permutation matmul.
    x_tm = jnp.transpose(x, (1, 0, 2)).reshape(L, G, Bt, C_in)
    x_tm = jnp.transpose(x_tm, (1, 0, 2, 3)).reshape(G * L * Bt, C_in).astype(f32)

    consts = [w1, b1, w2, b2, wih1, whh1, bl1, wih2, whh2, bl2,
              wfc1, bfc1, wfc2, bfc2]

    def _const_spec(c):
        zeros = (0,) * c.ndim
        return pl.BlockSpec(c.shape, lambda i: zeros)

    kernel = functools.partial(_cnn_lstm_kernel, Bt=Bt, T=T, H=H)

    out = pl.pallas_call(
        kernel,
        out_shape=jax.ShapeDtypeStruct((B, num_classes), f32),
        grid_spec=pltpu.PrefetchScalarGridSpec(
            num_scalar_prefetch=0,
            grid=(G,),
            in_specs=[pl.BlockSpec((L * Bt, C_in), lambda i: (i, 0))]
                     + [_const_spec(c) for c in consts],
            out_specs=pl.BlockSpec((Bt, num_classes), lambda i: (i, 0)),
            scratch_shapes=[pltpu.VMEM((T * Bt, 4 * H), f32)],
        ),
        compiler_params=pltpu.CompilerParams(dimension_semantics=("parallel",)),
    )(x_tm, *consts)
    return out


# ----------------------------------------------------------------------------
# Pure-JAX reference (mirrors the PyTorch forward, eval mode, f32 HIGHEST)
# ----------------------------------------------------------------------------
def ref_forward(x, params):
    prec = jax.lax.Precision.HIGHEST
    h = jnp.transpose(x, (0, 2, 1))                            # (B, C_in, L)
    for wname, bname in (("conv1_w", "conv1_b"), ("conv2_w", "conv2_b")):
        w, b = params[wname], params[bname]
        h = lax.conv_general_dilated(h, w, window_strides=(1,), padding=[(1, 1)],
                                     dimension_numbers=("NCH", "OIH", "NCH"),
                                     precision=prec)
        h = jax.nn.relu(h + b[None, :, None])
        Bx, Cx, Lx = h.shape
        h = jnp.max(h.reshape(Bx, Cx, Lx // 2, 2), axis=-1)    # MaxPool1d(2)
    seq = jnp.transpose(h, (0, 2, 1))                          # (B, T, C2)

    def lstm_layer(s, wih, whh, bih, bhh):
        Bz, T, _ = s.shape
        Hh = whh.shape[1]
        hh = jnp.zeros((Bz, Hh), jnp.float32)
        cc = jnp.zeros((Bz, Hh), jnp.float32)
        outs = []
        for t in range(T):
            g = (jnp.dot(s[:, t, :], wih.T, precision=prec)
                 + jnp.dot(hh, whh.T, precision=prec) + bih + bhh)
            i = jax.nn.sigmoid(g[:, 0:Hh])
            f = jax.nn.sigmoid(g[:, Hh:2 * Hh])
            gc = jnp.tanh(g[:, 2 * Hh:3 * Hh])
            o = jax.nn.sigmoid(g[:, 3 * Hh:4 * Hh])
            cc = f * cc + i * gc
            hh = o * jnp.tanh(cc)
            outs.append(hh)
        return jnp.stack(outs, axis=1)

    s1 = lstm_layer(seq, params["weight_ih_l0"], params["weight_hh_l0"],
                    params["bias_ih_l0"], params["bias_hh_l0"])
    s2 = lstm_layer(s1, params["weight_ih_l1"], params["weight_hh_l1"],
                    params["bias_ih_l1"], params["bias_hh_l1"])
    last = s2[:, -1, :]
    y = jax.nn.relu(jnp.dot(last, params["fc1_w"].T, precision=prec) + params["fc1_b"])
    return jnp.dot(y, params["fc2_w"].T, precision=prec) + params["fc2_b"]


# ----------------------------------------------------------------------------
if __name__ == "__main__":
    B, C_in, L, num_classes = 2, 4, 16, 3
    H, F1 = 32, 32            # lstm_hidden_size, size_linear_lyr
    C1, C2 = 8, 16            # initial_channels=8 doubled once (2 conv layers)

    key = jax.random.PRNGKey(0)
    ks = jax.random.split(key, 20)

    def rnd(k, shape, scale=0.2):
        return scale * jax.random.normal(k, shape, jnp.float32)

    params = {
        "conv1_w": rnd(ks[0], (C1, C_in, 3)), "conv1_b": rnd(ks[1], (C1,)),
        "conv2_w": rnd(ks[2], (C2, C1, 3)), "conv2_b": rnd(ks[3], (C2,)),
        "weight_ih_l0": rnd(ks[4], (4 * H, C2)), "weight_hh_l0": rnd(ks[5], (4 * H, H)),
        "bias_ih_l0": rnd(ks[6], (4 * H,)), "bias_hh_l0": rnd(ks[7], (4 * H,)),
        "weight_ih_l1": rnd(ks[8], (4 * H, H)), "weight_hh_l1": rnd(ks[9], (4 * H, H)),
        "bias_ih_l1": rnd(ks[10], (4 * H,)), "bias_hh_l1": rnd(ks[11], (4 * H,)),
        "fc1_w": rnd(ks[12], (F1, H)), "fc1_b": rnd(ks[13], (F1,)),
        "fc2_w": rnd(ks[14], (num_classes, F1)), "fc2_b": rnd(ks[15], (num_classes,)),
    }

    x = jax.random.normal(ks[16], (B, L, C_in), jnp.float32)   # (batch, seq, channels)

    y_kernel = jax.block_until_ready(cnn_lstm_forward(x, params))
    y_ref = jax.block_until_ready(ref_forward(x, params))

    assert y_kernel.shape == (B, num_classes)
    max_err = jnp.max(jnp.abs(y_kernel - y_ref))
    # bf16 MXU operands (f32 accumulation) vs. f32 HIGHEST reference.
    assert jnp.allclose(y_kernel, y_ref, atol=5e-2, rtol=5e-2), f"max abs err {max_err}"

    print("KERNEL_OK")
</pallas_src>

<mosaic_0001>
module attributes {stable_mosaic.version = 11 : i64} {
  func.func @_cnn_lstm_kernel(%arg0: i32, %arg1: memref<32x4xf32, #tpu.memory_space<vmem>>, %arg2: memref<3x4x8xbf16, #tpu.memory_space<vmem>>, %arg3: memref<1x8xf32, #tpu.memory_space<vmem>>, %arg4: memref<3x8x16xbf16, #tpu.memory_space<vmem>>, %arg5: memref<1x16xf32, #tpu.memory_space<vmem>>, %arg6: memref<16x128xbf16, #tpu.memory_space<vmem>>, %arg7: memref<32x128xbf16, #tpu.memory_space<vmem>>, %arg8: memref<1x128xf32, #tpu.memory_space<vmem>>, %arg9: memref<32x128xbf16, #tpu.memory_space<vmem>>, %arg10: memref<32x128xbf16, #tpu.memory_space<vmem>>, %arg11: memref<1x128xf32, #tpu.memory_space<vmem>>, %arg12: memref<32x32xbf16, #tpu.memory_space<vmem>>, %arg13: memref<1x32xf32, #tpu.memory_space<vmem>>, %arg14: memref<32x3xbf16, #tpu.memory_space<vmem>>, %arg15: memref<1x3xf32, #tpu.memory_space<vmem>>, %arg16: memref<2x3xf32, #tpu.memory_space<vmem>>, %arg17: memref<8x128xf32, #tpu.memory_space<vmem>>) attributes {dimension_semantics = [#tpu.dimension_semantics<parallel>], iteration_bounds = array<i64: 1>, scalar_prefetch = 0 : i64, scratch_operands = 1 : i64, tpu.core_type = #tpu.core_type<tc>, window_params = [{transform_indices = @transform_0, window_bounds = array<i64: 32, 4>}, {pipeline_mode = #tpu.pipeline_mode<synchronous>, transform_indices = @transform_1, window_bounds = array<i64: 3, 4, 8>}, {pipeline_mode = #tpu.pipeline_mode<synchronous>, transform_indices = @transform_2, window_bounds = array<i64: 1, 8>}, {pipeline_mode = #tpu.pipeline_mode<synchronous>, transform_indices = @transform_3, window_bounds = array<i64: 3, 8, 16>}, {pipeline_mode = #tpu.pipeline_mode<synchronous>, transform_indices = @transform_4, window_bounds = array<i64: 1, 16>}, {pipeline_mode = #tpu.pipeline_mode<synchronous>, transform_indices = @transform_5, window_bounds = array<i64: 16, 128>}, {pipeline_mode = #tpu.pipeline_mode<synchronous>, transform_indices = @transform_6, window_bounds = array<i64: 32, 128>}, {pipeline_mode = #tpu.pipeline_mode<synchronous>, transform_indices = @transform_7, window_bounds = array<i64: 1, 128>}, {pipeline_mode = #tpu.pipeline_mode<synchronous>, transform_indices = @transform_8, window_bounds = array<i64: 32, 128>}, {pipeline_mode = #tpu.pipeline_mode<synchronous>, transform_indices = @transform_9, window_bounds = array<i64: 32, 128>}, {pipeline_mode = #tpu.pipeline_mode<synchronous>, transform_indices = @transform_10, window_bounds = array<i64: 1, 128>}, {pipeline_mode = #tpu.pipeline_mode<synchronous>, transform_indices = @transform_11, window_bounds = array<i64: 32, 32>}, {pipeline_mode = #tpu.pipeline_mode<synchronous>, transform_indices = @transform_12, window_bounds = array<i64: 1, 32>}, {pipeline_mode = #tpu.pipeline_mode<synchronous>, transform_indices = @transform_13, window_bounds = array<i64: 32, 3>}, {pipeline_mode = #tpu.pipeline_mode<synchronous>, transform_indices = @transform_14, window_bounds = array<i64: 1, 3>}, {transform_indices = @transform_15, window_bounds = array<i64: 2, 3>}]} {
    %c0 = arith.constant 0 : index
    %c0_0 = arith.constant 0 : index
    %0 = vector.load %arg1[%c0, %c0_0] : memref<32x4xf32, #tpu.memory_space<vmem>>, vector<32x4xf32>
    %cst = arith.constant 0.000000e+00 : f32
    %1 = vector.broadcast %cst : f32 to vector<2x4xf32>
    %2 = vector.extract_strided_slice %0 {offsets = [0, 0], sizes = [30, 4], strides = [1, 1]} : vector<32x4xf32> to vector<30x4xf32>
    %3 = tpu.concatenate %1, %2 in 0 : vector<2x4xf32>, vector<30x4xf32> -> vector<32x4xf32>
    %4 = vector.extract_strided_slice %0 {offsets = [2, 0], sizes = [30, 4], strides = [1, 1]} : vector<32x4xf32> to vector<30x4xf32>
    %5 = tpu.concatenate %4, %1 in 0 : vector<30x4xf32>, vector<2x4xf32> -> vector<32x4xf32>
    %c0_1 = arith.constant 0 : index
    %c0_2 = arith.constant 0 : index
    %c0_3 = arith.constant 0 : index
    %6 = vector.load %arg2[%c0_1, %c0_2, %c0_3] : memref<3x4x8xbf16, #tpu.memory_space<vmem>>, vector<1x4x8xbf16>
    %7 = vector.shape_cast %6 : vector<1x4x8xbf16> to vector<4x8xbf16>
    %8 = arith.truncf %3 : vector<32x4xf32> to vector<32x4xbf16>
    %cst_4 = arith.constant dense<0.000000e+00> : vector<32x8xf32>
    %9 = tpu.matmul %8, %7, %cst_4 {dimension_numbers = #tpu.dot_dimension_numbers<[1], [0], [0], [1], [0, 0, 1, 1], [], []>} : vector<32x4xbf16>, vector<4x8xbf16>, vector<32x8xf32> -> vector<32x8xf32>
    %c1 = arith.constant 1 : index
    %c0_5 = arith.constant 0 : index
    %c0_6 = arith.constant 0 : index
    %10 = vector.load %arg2[%c1, %c0_5, %c0_6] : memref<3x4x8xbf16, #tpu.memory_space<vmem>>, vector<1x4x8xbf16>
    %11 = vector.shape_cast %10 : vector<1x4x8xbf16> to vector<4x8xbf16>
    %12 = arith.truncf %0 : vector<32x4xf32> to vector<32x4xbf16>
    %cst_7 = arith.constant dense<0.000000e+00> : vector<32x8xf32>
    %13 = tpu.matmul %12, %11, %cst_7 {dimension_numbers = #tpu.dot_dimension_numbers<[1], [0], [0], [1], [0, 0, 1, 1], [], []>} : vector<32x4xbf16>, vector<4x8xbf16>, vector<32x8xf32> -> vector<32x8xf32>
    %14 = arith.addf %9, %13 : vector<32x8xf32>
    %c2 = arith.constant 2 : index
    %c0_8 = arith.constant 0 : index
    %c0_9 = arith.constant 0 : index
    %15 = vector.load %arg2[%c2, %c0_8, %c0_9] : memref<3x4x8xbf16, #tpu.memory_space<vmem>>, vector<1x4x8xbf16>
    %16 = vector.shape_cast %15 : vector<1x4x8xbf16> to vector<4x8xbf16>
    %17 = arith.truncf %5 : vector<32x4xf32> to vector<32x4xbf16>
    %cst_10 = arith.constant dense<0.000000e+00> : vector<32x8xf32>
    %18 = tpu.matmul %17, %16, %cst_10 {dimension_numbers = #tpu.dot_dimension_numbers<[1], [0], [0], [1], [0, 0, 1, 1], [], []>} : vector<32x4xbf16>, vector<4x8xbf16>, vector<32x8xf32> -> vector<32x8xf32>
    %19 = arith.addf %14, %18 : vector<32x8xf32>
    %c0_11 = arith.constant 0 : index
    %c0_12 = arith.constant 0 : index
    %20 = vector.load %arg3[%c0_11, %c0_12] : memref<1x8xf32, #tpu.memory_space<vmem>>, vector<1x8xf32>
    %21 = vector.broadcast %20 : vector<1x8xf32> to vector<32x8xf32>
    %22 = arith.addf %19, %21 : vector<32x8xf32>
    %cst_13 = arith.constant 0.000000e+00 : f32
    %23 = vector.broadcast %cst_13 : f32 to vector<32x8xf32>
    %24 = arith.maximumf %22, %23 : vector<32x8xf32>
    %25 = vector.shape_cast %24 : vector<32x8xf32> to vector<8x4x8xf32>
    %26 = vector.extract_strided_slice %25 {offsets = [0, 0, 0], sizes = [8, 2, 8], strides = [1, 1, 1]} : vector<8x4x8xf32> to vector<8x2x8xf32>
    %27 = vector.extract_strided_slice %25 {offsets = [0, 2, 0], sizes = [8, 2, 8], strides = [1, 1, 1]} : vector<8x4x8xf32> to vector<8x2x8xf32>
    %28 = arith.maximumf %26, %27 : vector<8x2x8xf32>
    %29 = vector.shape_cast %28 : vector<8x2x8xf32> to vector<16x8xf32>
    %cst_14 = arith.constant 0.000000e+00 : f32
    %30 = vector.broadcast %cst_14 : f32 to vector<2x8xf32>
    %31 = vector.extract_strided_slice %29 {offsets = [0, 0], sizes = [14, 8], strides = [1, 1]} : vector<16x8xf32> to vector<14x8xf32>
    %32 = tpu.concatenate %30, %31 in 0 : vector<2x8xf32>, vector<14x8xf32> -> vector<16x8xf32>
    %33 = vector.extract_strided_slice %29 {offsets = [2, 0], sizes = [14, 8], strides = [1, 1]} : vector<16x8xf32> to vector<14x8xf32>
    %34 = tpu.concatenate %33, %30 in 0 : vector<14x8xf32>, vector<2x8xf32> -> vector<16x8xf32>
    %c0_15 = arith.constant 0 : index
    %c0_16 = arith.constant 0 : index
    %c0_17 = arith.constant 0 : index
    %35 = vector.load %arg4[%c0_15, %c0_16, %c0_17] : memref<3x8x16xbf16, #tpu.memory_space<vmem>>, vector<1x8x16xbf16>
    %36 = vector.shape_cast %35 : vector<1x8x16xbf16> to vector<8x16xbf16>
    %37 = arith.truncf %32 : vector<16x8xf32> to vector<16x8xbf16>
    %cst_18 = arith.constant dense<0.000000e+00> : vector<16x16xf32>
    %38 = tpu.matmul %37, %36, %cst_18 {dimension_numbers = #tpu.dot_dimension_numbers<[1], [0], [0], [1], [0, 0, 1, 1], [], []>} : vector<16x8xbf16>, vector<8x16xbf16>, vector<16x16xf32> -> vector<16x16xf32>
    %c1_19 = arith.constant 1 : index
    %c0_20 = arith.constant 0 : index
    %c0_21 = arith.constant 0 : index
    %39 = vector.load %arg4[%c1_19, %c0_20, %c0_21] : memref<3x8x16xbf16, #tpu.memory_space<vmem>>, vector<1x8x16xbf16>
    %40 = vector.shape_cast %39 : vector<1x8x16xbf16> to vector<8x16xbf16>
    %41 = arith.truncf %29 : vector<16x8xf32> to vector<16x8xbf16>
    %cst_22 = arith.constant dense<0.000000e+00> : vector<16x16xf32>
    %42 = tpu.matmul %41, %40, %cst_22 {dimension_numbers = #tpu.dot_dimension_numbers<[1], [0], [0], [1], [0, 0, 1, 1], [], []>} : vector<16x8xbf16>, vector<8x16xbf16>, vector<16x16xf32> -> vector<16x16xf32>
    %43 = arith.addf %38, %42 : vector<16x16xf32>
    %c2_23 = arith.constant 2 : index
    %c0_24 = arith.constant 0 : index
    %c0_25 = arith.constant 0 : index
    %44 = vector.load %arg4[%c2_23, %c0_24, %c0_25] : memref<3x8x16xbf16, #tpu.memory_space<vmem>>, vector<1x8x16xbf16>
    %45 = vector.shape_cast %44 : vector<1x8x16xbf16> to vector<8x16xbf16>
    %46 = arith.truncf %34 : vector<16x8xf32> to vector<16x8xbf16>
    %cst_26 = arith.constant dense<0.000000e+00> : vector<16x16xf32>
    %47 = tpu.matmul %46, %45, %cst_26 {dimension_numbers = #tpu.dot_dimension_numbers<[1], [0], [0], [1], [0, 0, 1, 1], [], []>} : vector<16x8xbf16>, vector<8x16xbf16>, vector<16x16xf32> -> vector<16x16xf32>
    %48 = arith.addf %43, %47 : vector<16x16xf32>
    %c0_27 = arith.constant 0 : index
    %c0_28 = arith.constant 0 : index
    %49 = vector.load %arg5[%c0_27, %c0_28] : memref<1x16xf32, #tpu.memory_space<vmem>>, vector<1x16xf32>
    %50 = vector.broadcast %49 : vector<1x16xf32> to vector<16x16xf32>
    %51 = arith.addf %48, %50 : vector<16x16xf32>
    %cst_29 = arith.constant 0.000000e+00 : f32
    %52 = vector.broadcast %cst_29 : f32 to vector<16x16xf32>
    %53 = arith.maximumf %51, %52 : vector<16x16xf32>
    %54 = vector.shape_cast %53 : vector<16x16xf32> to vector<4x4x16xf32>
    %55 = vector.extract_strided_slice %54 {offsets = [0, 0, 0], sizes = [4, 2, 16], strides = [1, 1, 1]} : vector<4x4x16xf32> to vector<4x2x16xf32>
    %56 = vector.extract_strided_slice %54 {offsets = [0, 2, 0], sizes = [4, 2, 16], strides = [1, 1, 1]} : vector<4x4x16xf32> to vector<4x2x16xf32>
    %57 = arith.maximumf %55, %56 : vector<4x2x16xf32>
    %58 = vector.shape_cast %57 : vector<4x2x16xf32> to vector<8x16xf32>
    %c0_30 = arith.constant 0 : index
    %c0_31 = arith.constant 0 : index
    %59 = vector.load %arg6[%c0_30, %c0_31] : memref<16x128xbf16, #tpu.memory_space<vmem>>, vector<16x128xbf16>
    %60 = arith.truncf %58 : vector<8x16xf32> to vector<8x16xbf16>
    %cst_32 = arith.constant dense<0.000000e+00> : vector<8x128xf32>
    %61 = tpu.matmul %60, %59, %cst_32 {dimension_numbers = #tpu.dot_dimension_numbers<[1], [0], [0], [1], [0, 0, 1, 1], [], []>} : vector<8x16xbf16>, vector<16x128xbf16>, vector<8x128xf32> -> vector<8x128xf32>
    %c0_33 = arith.constant 0 : index
    %c0_34 = arith.constant 0 : index
    %62 = vector.load %arg8[%c0_33, %c0_34] : memref<1x128xf32, #tpu.memory_space<vmem>>, vector<1x128xf32>
    %63 = vector.broadcast %62 : vector<1x128xf32> to vector<8x128xf32>
    %64 = arith.addf %61, %63 : vector<8x128xf32>
    %c0_35 = arith.constant 0 : index
    %c0_36 = arith.constant 0 : index
    %65 = vector.load %arg17[%c0_35, %c0_36] : memref<8x128xf32, #tpu.memory_space<vmem>>, vector<8x128xf32>
    tpu.vector_store %arg17[%c0_35, %c0_36], %64 {strides = array<i32>} : memref<8x128xf32, #tpu.memory_space<vmem>>, vector<8x128xf32>,
    %c0_37 = arith.constant 0 : index
    %c0_38 = arith.constant 0 : index
    %66 = vector.load %arg7[%c0_37, %c0_38] : memref<32x128xbf16, #tpu.memory_space<vmem>>, vector<32x128xbf16>
    %c0_39 = arith.constant 0 : index
    %c0_40 = arith.constant 0 : index
    %67 = vector.load %arg9[%c0_39, %c0_40] : memref<32x128xbf16, #tpu.memory_space<vmem>>, vector<32x128xbf16>
    %c0_41 = arith.constant 0 : index
    %c0_42 = arith.constant 0 : index
    %68 = vector.load %arg10[%c0_41, %c0_42] : memref<32x128xbf16, #tpu.memory_space<vmem>>, vector<32x128xbf16>
    %c0_43 = arith.constant 0 : index
    %c0_44 = arith.constant 0 : index
    %69 = vector.load %arg11[%c0_43, %c0_44] : memref<1x128xf32, #tpu.memory_space<vmem>>, vector<1x128xf32>
    %70 = vector.shape_cast %69 : vector<1x128xf32> to vector<1x128xf32>
    %71 = vector.broadcast %70 : vector<1x128xf32> to vector<2x128xf32>
    %cst_45 = arith.constant 0.000000e+00 : f32
    %72 = vector.broadcast %cst_45 : f32 to vector<2x32xf32>
    %cst_46 = arith.constant 0.000000e+00 : f32
    %73 = vector.broadcast %cst_46 : f32 to vector<2x32xf32>
    %cst_47 = arith.constant 0.000000e+00 : f32
    %74 = vector.broadcast %cst_47 : f32 to vector<2x32xf32>
    %cst_48 = arith.constant 0.000000e+00 : f32
    %75 = vector.broadcast %cst_48 : f32 to vector<2x32xf32>
    %c0_49 = arith.constant 0 : index
    %c0_50 = arith.constant 0 : index
    %76 = vector.load %arg17[%c0_49, %c0_50] : memref<8x128xf32, #tpu.memory_space<vmem>>, vector<2x128xf32>
    %77 = arith.truncf %72 : vector<2x32xf32> to vector<2x32xbf16>
    %cst_51 = arith.constant dense<0.000000e+00> : vector<2x128xf32>
    %78 = tpu.matmul %77, %66, %cst_51 {dimension_numbers = #tpu.dot_dimension_numbers<[1], [0], [0], [1], [0, 0, 1, 1], [], []>} : vector<2x32xbf16>, vector<32x128xbf16>, vector<2x128xf32> -> vector<2x128xf32>
    %79 = arith.addf %76, %78 : vector<2x128xf32>
    %80 = vector.extract_strided_slice %79 {offsets = [0, 0], sizes = [2, 32], strides = [1, 1]} : vector<2x128xf32> to vector<2x32xf32>
    %cst_52 = arith.constant 5.000000e-01 : f32
    %81 = vector.broadcast %cst_52 : f32 to vector<2x32xf32>
    %82 = arith.mulf %81, %80 : vector<2x32xf32>
    %83 = math.tanh %82 : vector<2x32xf32>
    %cst_53 = arith.constant 1.000000e+00 : f32
    %84 = vector.broadcast %cst_53 : f32 to vector<2x32xf32>
    %85 = arith.addf %83, %84 : vector<2x32xf32>
    %cst_54 = arith.constant 5.000000e-01 : f32
    %86 = vector.broadcast %cst_54 : f32 to vector<2x32xf32>
    %87 = arith.mulf %86, %85 : vector<2x32xf32>
    %88 = vector.extract_strided_slice %79 {offsets = [0, 32], sizes = [2, 32], strides = [1, 1]} : vector<2x128xf32> to vector<2x32xf32>
    %cst_55 = arith.constant 5.000000e-01 : f32
    %89 = vector.broadcast %cst_55 : f32 to vector<2x32xf32>
    %90 = arith.mulf %89, %88 : vector<2x32xf32>
    %91 = math.tanh %90 : vector<2x32xf32>
    %cst_56 = arith.constant 1.000000e+00 : f32
    %92 = vector.broadcast %cst_56 : f32 to vector<2x32xf32>
    %93 = arith.addf %91, %92 : vector<2x32xf32>
    %cst_57 = arith.constant 5.000000e-01 : f32
    %94 = vector.broadcast %cst_57 : f32 to vector<2x32xf32>
    %95 = arith.mulf %94, %93 : vector<2x32xf32>
    %96 = vector.extract_strided_slice %79 {offsets = [0, 64], sizes = [2, 32], strides = [1, 1]} : vector<2x128xf32> to vector<2x32xf32>
    %97 = math.tanh %96 : vector<2x32xf32>
    %98 = vector.extract_strided_slice %79 {offsets = [0, 96], sizes = [2, 32], strides = [1, 1]} : vector<2x128xf32> to vector<2x32xf32>
    %cst_58 = arith.constant 5.000000e-01 : f32
    %99 = vector.broadcast %cst_58 : f32 to vector<2x32xf32>
    %100 = arith.mulf %99, %98 : vector<2x32xf32>
    %101 = math.tanh %100 : vector<2x32xf32>
    %cst_59 = arith.constant 1.000000e+00 : f32
    %102 = vector.broadcast %cst_59 : f32 to vector<2x32xf32>
    %103 = arith.addf %101, %102 : vector<2x32xf32>
    %cst_60 = arith.constant 5.000000e-01 : f32
    %104 = vector.broadcast %cst_60 : f32 to vector<2x32xf32>
    %105 = arith.mulf %104, %103 : vector<2x32xf32>
    %106 = arith.mulf %95, %73 : vector<2x32xf32>
    %107 = arith.mulf %87, %97 : vector<2x32xf32>
    %108 = arith.addf %106, %107 : vector<2x32xf32>
    %109 = math.tanh %108 : vector<2x32xf32>
    %110 = arith.mulf %105, %109 : vector<2x32xf32>
    %111 = arith.truncf %110 : vector<2x32xf32> to vector<2x32xbf16>
    %cst_61 = arith.constant dense<0.000000e+00> : vector<2x128xf32>
    %112 = tpu.matmul %111, %67, %cst_61 {dimension_numbers = #tpu.dot_dimension_numbers<[1], [0], [0], [1], [0, 0, 1, 1], [], []>} : vector<2x32xbf16>, vector<32x128xbf16>, vector<2x128xf32> -> vector<2x128xf32>
    %113 = arith.truncf %74 : vector<2x32xf32> to vector<2x32xbf16>
    %cst_62 = arith.constant dense<0.000000e+00> : vector<2x128xf32>
    %114 = tpu.matmul %113, %68, %cst_62 {dimension_numbers = #tpu.dot_dimension_numbers<[1], [0], [0], [1], [0, 0, 1, 1], [], []>} : vector<2x32xbf16>, vector<32x128xbf16>, vector<2x128xf32> -> vector<2x128xf32>
    %115 = arith.addf %112, %114 : vector<2x128xf32>
    %116 = arith.addf %115, %71 : vector<2x128xf32>
    %117 = vector.extract_strided_slice %116 {offsets = [0, 0], sizes = [2, 32], strides = [1, 1]} : vector<2x128xf32> to vector<2x32xf32>
    %cst_63 = arith.constant 5.000000e-01 : f32
    %118 = vector.broadcast %cst_63 : f32 to vector<2x32xf32>
    %119 = arith.mulf %118, %117 : vector<2x32xf32>
    %120 = math.tanh %119 : vector<2x32xf32>
    %cst_64 = arith.constant 1.000000e+00 : f32
    %121 = vector.broadcast %cst_64 : f32 to vector<2x32xf32>
    %122 = arith.addf %120, %121 : vector<2x32xf32>
    %cst_65 = arith.constant 5.000000e-01 : f32
    %123 = vector.broadcast %cst_65 : f32 to vector<2x32xf32>
    %124 = arith.mulf %123, %122 : vector<2x32xf32>
    %125 = vector.extract_strided_slice %116 {offsets = [0, 32], sizes = [2, 32], strides = [1, 1]} : vector<2x128xf32> to vector<2x32xf32>
    %cst_66 = arith.constant 5.000000e-01 : f32
    %126 = vector.broadcast %cst_66 : f32 to vector<2x32xf32>
    %127 = arith.mulf %126, %125 : vector<2x32xf32>
    %128 = math.tanh %127 : vector<2x32xf32>
    %cst_67 = arith.constant 1.000000e+00 : f32
    %129 = vector.broadcast %cst_67 : f32 to vector<2x32xf32>
    %130 = arith.addf %128, %129 : vector<2x32xf32>
    %cst_68 = arith.constant 5.000000e-01 : f32
    %131 = vector.broadcast %cst_68 : f32 to vector<2x32xf32>
    %132 = arith.mulf %131, %130 : vector<2x32xf32>
    %133 = vector.extract_strided_slice %116 {offsets = [0, 64], sizes = [2, 32], strides = [1, 1]} : vector<2x128xf32> to vector<2x32xf32>
    %134 = math.tanh %133 : vector<2x32xf32>
    %135 = vector.extract_strided_slice %116 {offsets = [0, 96], sizes = [2, 32], strides = [1, 1]} : vector<2x128xf32> to vector<2x32xf32>
    %cst_69 = arith.constant 5.000000e-01 : f32
    %136 = vector.broadcast %cst_69 : f32 to vector<2x32xf32>
    %137 = arith.mulf %136, %135 : vector<2x32xf32>
    %138 = math.tanh %137 : vector<2x32xf32>
    %cst_70 = arith.constant 1.000000e+00 : f32
    %139 = vector.broadcast %cst_70 : f32 to vector<2x32xf32>
    %140 = arith.addf %138, %139 : vector<2x32xf32>
    %cst_71 = arith.constant 5.000000e-01 : f32
    %141 = vector.broadcast %cst_71 : f32 to vector<2x32xf32>
    %142 = arith.mulf %141, %140 : vector<2x32xf32>
    %143 = arith.mulf %132, %75 : vector<2x32xf32>
    %144 = arith.mulf %124, %134 : vector<2x32xf32>
    %145 = arith.addf %143, %144 : vector<2x32xf32>
    %146 = math.tanh %145 : vector<2x32xf32>
    %147 = arith.mulf %142, %146 : vector<2x32xf32>
    %c2_72 = arith.constant 2 : index
    %c0_73 = arith.constant 0 : index
    %148 = vector.load %arg17[%c2_72, %c0_73] : memref<8x128xf32, #tpu.memory_space<vmem>>, vector<2x128xf32>
    %149 = arith.truncf %110 : vector<2x32xf32> to vector<2x32xbf16>
    %cst_74 = arith.constant dense<0.000000e+00> : vector<2x128xf32>
    %150 = tpu.matmul %149, %66, %cst_74 {dimension_numbers = #tpu.dot_dimension_numbers<[1], [0], [0], [1], [0, 0, 1, 1], [], []>} : vector<2x32xbf16>, vector<32x128xbf16>, vector<2x128xf32> -> vector<2x128xf32>
    %151 = arith.addf %148, %150 : vector<2x128xf32>
    %152 = vector.extract_strided_slice %151 {offsets = [0, 0], sizes = [2, 32], strides = [1, 1]} : vector<2x128xf32> to vector<2x32xf32>
    %cst_75 = arith.constant 5.000000e-01 : f32
    %153 = vector.broadcast %cst_75 : f32 to vector<2x32xf32>
    %154 = arith.mulf %153, %152 : vector<2x32xf32>
    %155 = math.tanh %154 : vector<2x32xf32>
    %cst_76 = arith.constant 1.000000e+00 : f32
    %156 = vector.broadcast %cst_76 : f32 to vector<2x32xf32>
    %157 = arith.addf %155, %156 : vector<2x32xf32>
    %cst_77 = arith.constant 5.000000e-01 : f32
    %158 = vector.broadcast %cst_77 : f32 to vector<2x32xf32>
    %159 = arith.mulf %158, %157 : vector<2x32xf32>
    %160 = vector.extract_strided_slice %151 {offsets = [0, 32], sizes = [2, 32], strides = [1, 1]} : vector<2x128xf32> to vector<2x32xf32>
    %cst_78 = arith.constant 5.000000e-01 : f32
    %161 = vector.broadcast %cst_78 : f32 to vector<2x32xf32>
    %162 = arith.mulf %161, %160 : vector<2x32xf32>
    %163 = math.tanh %162 : vector<2x32xf32>
    %cst_79 = arith.constant 1.000000e+00 : f32
    %164 = vector.broadcast %cst_79 : f32 to vector<2x32xf32>
    %165 = arith.addf %163, %164 : vector<2x32xf32>
    %cst_80 = arith.constant 5.000000e-01 : f32
    %166 = vector.broadcast %cst_80 : f32 to vector<2x32xf32>
    %167 = arith.mulf %166, %165 : vector<2x32xf32>
    %168 = vector.extract_strided_slice %151 {offsets = [0, 64], sizes = [2, 32], strides = [1, 1]} : vector<2x128xf32> to vector<2x32xf32>
    %169 = math.tanh %168 : vector<2x32xf32>
    %170 = vector.extract_strided_slice %151 {offsets = [0, 96], sizes = [2, 32], strides = [1, 1]} : vector<2x128xf32> to vector<2x32xf32>
    %cst_81 = arith.constant 5.000000e-01 : f32
    %171 = vector.broadcast %cst_81 : f32 to vector<2x32xf32>
    %172 = arith.mulf %171, %170 : vector<2x32xf32>
    %173 = math.tanh %172 : vector<2x32xf32>
    %cst_82 = arith.constant 1.000000e+00 : f32
    %174 = vector.broadcast %cst_82 : f32 to vector<2x32xf32>
    %175 = arith.addf %173, %174 : vector<2x32xf32>
    %cst_83 = arith.constant 5.000000e-01 : f32
    %176 = vector.broadcast %cst_83 : f32 to vector<2x32xf32>
    %177 = arith.mulf %176, %175 : vector<2x32xf32>
    %178 = arith.mulf %167, %108 : vector<2x32xf32>
    %179 = arith.mulf %159, %169 : vector<2x32xf32>
    %180 = arith.addf %178, %179 : vector<2x32xf32>
    %181 = math.tanh %180 : vector<2x32xf32>
    %182 = arith.mulf %177, %181 : vector<2x32xf32>
    %183 = arith.truncf %182 : vector<2x32xf32> to vector<2x32xbf16>
    %cst_84 = arith.constant dense<0.000000e+00> : vector<2x128xf32>
    %184 = tpu.matmul %183, %67, %cst_84 {dimension_numbers = #tpu.dot_dimension_numbers<[1], [0], [0], [1], [0, 0, 1, 1], [], []>} : vector<2x32xbf16>, vector<32x128xbf16>, vector<2x128xf32> -> vector<2x128xf32>
    %185 = arith.truncf %147 : vector<2x32xf32> to vector<2x32xbf16>
    %cst_85 = arith.constant dense<0.000000e+00> : vector<2x128xf32>
    %186 = tpu.matmul %185, %68, %cst_85 {dimension_numbers = #tpu.dot_dimension_numbers<[1], [0], [0], [1], [0, 0, 1, 1], [], []>} : vector<2x32xbf16>, vector<32x128xbf16>, vector<2x128xf32> -> vector<2x128xf32>
    %187 = arith.addf %184, %186 : vector<2x128xf32>
    %188 = arith.addf %187, %71 : vector<2x128xf32>
    %189 = vector.extract_strided_slice %188 {offsets = [0, 0], sizes = [2, 32], strides = [1, 1]} : vector<2x128xf32> to vector<2x32xf32>
    %cst_86 = arith.constant 5.000000e-01 : f32
    %190 = vector.broadcast %cst_86 : f32 to vector<2x32xf32>
    %191 = arith.mulf %190, %189 : vector<2x32xf32>
    %192 = math.tanh %191 : vector<2x32xf32>
    %cst_87 = arith.constant 1.000000e+00 : f32
    %193 = vector.broadcast %cst_87 : f32 to vector<2x32xf32>
    %194 = arith.addf %192, %193 : vector<2x32xf32>
    %cst_88 = arith.constant 5.000000e-01 : f32
    %195 = vector.broadcast %cst_88 : f32 to vector<2x32xf32>
    %196 = arith.mulf %195, %194 : vector<2x32xf32>
    %197 = vector.extract_strided_slice %188 {offsets = [0, 32], sizes = [2, 32], strides = [1, 1]} : vector<2x128xf32> to vector<2x32xf32>
    %cst_89 = arith.constant 5.000000e-01 : f32
    %198 = vector.broadcast %cst_89 : f32 to vector<2x32xf32>
    %199 = arith.mulf %198, %197 : vector<2x32xf32>
    %200 = math.tanh %199 : vector<2x32xf32>
    %cst_90 = arith.constant 1.000000e+00 : f32
    %201 = vector.broadcast %cst_90 : f32 to vector<2x32xf32>
    %202 = arith.addf %200, %201 : vector<2x32xf32>
    %cst_91 = arith.constant 5.000000e-01 : f32
    %203 = vector.broadcast %cst_91 : f32 to vector<2x32xf32>
    %204 = arith.mulf %203, %202 : vector<2x32xf32>
    %205 = vector.extract_strided_slice %188 {offsets = [0, 64], sizes = [2, 32], strides = [1, 1]} : vector<2x128xf32> to vector<2x32xf32>
    %206 = math.tanh %205 : vector<2x32xf32>
    %207 = vector.extract_strided_slice %188 {offsets = [0, 96], sizes = [2, 32], strides = [1, 1]} : vector<2x128xf32> to vector<2x32xf32>
    %cst_92 = arith.constant 5.000000e-01 : f32
    %208 = vector.broadcast %cst_92 : f32 to vector<2x32xf32>
    %209 = arith.mulf %208, %207 : vector<2x32xf32>
    %210 = math.tanh %209 : vector<2x32xf32>
    %cst_93 = arith.constant 1.000000e+00 : f32
    %211 = vector.broadcast %cst_93 : f32 to vector<2x32xf32>
    %212 = arith.addf %210, %211 : vector<2x32xf32>
    %cst_94 = arith.constant 5.000000e-01 : f32
    %213 = vector.broadcast %cst_94 : f32 to vector<2x32xf32>
    %214 = arith.mulf %213, %212 : vector<2x32xf32>
    %215 = arith.mulf %204, %145 : vector<2x32xf32>
    %216 = arith.mulf %196, %206 : vector<2x32xf32>
    %217 = arith.addf %215, %216 : vector<2x32xf32>
    %218 = math.tanh %217 : vector<2x32xf32>
    %219 = arith.mulf %214, %218 : vector<2x32xf32>
    %c4 = arith.constant 4 : index
    %c0_95 = arith.constant 0 : index
    %220 = vector.load %arg17[%c4, %c0_95] : memref<8x128xf32, #tpu.memory_space<vmem>>, vector<2x128xf32>
    %221 = arith.truncf %182 : vector<2x32xf32> to vector<2x32xbf16>
    %cst_96 = arith.constant dense<0.000000e+00> : vector<2x128xf32>
    %222 = tpu.matmul %221, %66, %cst_96 {dimension_numbers = #tpu.dot_dimension_numbers<[1], [0], [0], [1], [0, 0, 1, 1], [], []>} : vector<2x32xbf16>, vector<32x128xbf16>, vector<2x128xf32> -> vector<2x128xf32>
    %223 = arith.addf %220, %222 : vector<2x128xf32>
    %224 = vector.extract_strided_slice %223 {offsets = [0, 0], sizes = [2, 32], strides = [1, 1]} : vector<2x128xf32> to vector<2x32xf32>
    %cst_97 = arith.constant 5.000000e-01 : f32
    %225 = vector.broadcast %cst_97 : f32 to vector<2x32xf32>
    %226 = arith.mulf %225, %224 : vector<2x32xf32>
    %227 = math.tanh %226 : vector<2x32xf32>
    %cst_98 = arith.constant 1.000000e+00 : f32
    %228 = vector.broadcast %cst_98 : f32 to vector<2x32xf32>
    %229 = arith.addf %227, %228 : vector<2x32xf32>
    %cst_99 = arith.constant 5.000000e-01 : f32
    %230 = vector.broadcast %cst_99 : f32 to vector<2x32xf32>
    %231 = arith.mulf %230, %229 : vector<2x32xf32>
    %232 = vector.extract_strided_slice %223 {offsets = [0, 32], sizes = [2, 32], strides = [1, 1]} : vector<2x128xf32> to vector<2x32xf32>
    %cst_100 = arith.constant 5.000000e-01 : f32
    %233 = vector.broadcast %cst_100 : f32 to vector<2x32xf32>
    %234 = arith.mulf %233, %232 : vector<2x32xf32>
    %235 = math.tanh %234 : vector<2x32xf32>
    %cst_101 = arith.constant 1.000000e+00 : f32
    %236 = vector.broadcast %cst_101 : f32 to vector<2x32xf32>
    %237 = arith.addf %235, %236 : vector<2x32xf32>
    %cst_102 = arith.constant 5.000000e-01 : f32
    %238 = vector.broadcast %cst_102 : f32 to vector<2x32xf32>
    %239 = arith.mulf %238, %237 : vector<2x32xf32>
    %240 = vector.extract_strided_slice %223 {offsets = [0, 64], sizes = [2, 32], strides = [1, 1]} : vector<2x128xf32> to vector<2x32xf32>
    %241 = math.tanh %240 : vector<2x32xf32>
    %242 = vector.extract_strided_slice %223 {offsets = [0, 96], sizes = [2, 32], strides = [1, 1]} : vector<2x128xf32> to vector<2x32xf32>
    %cst_103 = arith.constant 5.000000e-01 : f32
    %243 = vector.broadcast %cst_103 : f32 to vector<2x32xf32>
    %244 = arith.mulf %243, %242 : vector<2x32xf32>
    %245 = math.tanh %244 : vector<2x32xf32>
    %cst_104 = arith.constant 1.000000e+00 : f32
    %246 = vector.broadcast %cst_104 : f32 to vector<2x32xf32>
    %247 = arith.addf %245, %246 : vector<2x32xf32>
    %cst_105 = arith.constant 5.000000e-01 : f32
    %248 = vector.broadcast %cst_105 : f32 to vector<2x32xf32>
    %249 = arith.mulf %248, %247 : vector<2x32xf32>
    %250 = arith.mulf %239, %180 : vector<2x32xf32>
    %251 = arith.mulf %231, %241 : vector<2x32xf32>
    %252 = arith.addf %250, %251 : vector<2x32xf32>
    %253 = math.tanh %252 : vector<2x32xf32>
    %254 = arith.mulf %249, %253 : vector<2x32xf32>
    %255 = arith.truncf %254 : vector<2x32xf32> to vector<2x32xbf16>
    %cst_106 = arith.constant dense<0.000000e+00> : vector<2x128xf32>
    %256 = tpu.matmul %255, %67, %cst_106 {dimension_numbers = #tpu.dot_dimension_numbers<[1], [0], [0], [1], [0, 0, 1, 1], [], []>} : vector<2x32xbf16>, vector<32x128xbf16>, vector<2x128xf32> -> vector<2x128xf32>
    %257 = arith.truncf %219 : vector<2x32xf32> to vector<2x32xbf16>
    %cst_107 = arith.constant dense<0.000000e+00> : vector<2x128xf32>
    %258 = tpu.matmul %257, %68, %cst_107 {dimension_numbers = #tpu.dot_dimension_numbers<[1], [0], [0], [1], [0, 0, 1, 1], [], []>} : vector<2x32xbf16>, vector<32x128xbf16>, vector<2x128xf32> -> vector<2x128xf32>
    %259 = arith.addf %256, %258 : vector<2x128xf32>
    %260 = arith.addf %259, %71 : vector<2x128xf32>
    %261 = vector.extract_strided_slice %260 {offsets = [0, 0], sizes = [2, 32], strides = [1, 1]} : vector<2x128xf32> to vector<2x32xf32>
    %cst_108 = arith.constant 5.000000e-01 : f32
    %262 = vector.broadcast %cst_108 : f32 to vector<2x32xf32>
    %263 = arith.mulf %262, %261 : vector<2x32xf32>
    %264 = math.tanh %263 : vector<2x32xf32>
    %cst_109 = arith.constant 1.000000e+00 : f32
    %265 = vector.broadcast %cst_109 : f32 to vector<2x32xf32>
    %266 = arith.addf %264, %265 : vector<2x32xf32>
    %cst_110 = arith.constant 5.000000e-01 : f32
    %267 = vector.broadcast %cst_110 : f32 to vector<2x32xf32>
    %268 = arith.mulf %267, %266 : vector<2x32xf32>
    %269 = vector.extract_strided_slice %260 {offsets = [0, 32], sizes = [2, 32], strides = [1, 1]} : vector<2x128xf32> to vector<2x32xf32>
    %cst_111 = arith.constant 5.000000e-01 : f32
    %270 = vector.broadcast %cst_111 : f32 to vector<2x32xf32>
    %271 = arith.mulf %270, %269 : vector<2x32xf32>
    %272 = math.tanh %271 : vector<2x32xf32>
    %cst_112 = arith.constant 1.000000e+00 : f32
    %273 = vector.broadcast %cst_112 : f32 to vector<2x32xf32>
    %274 = arith.addf %272, %273 : vector<2x32xf32>
    %cst_113 = arith.constant 5.000000e-01 : f32
    %275 = vector.broadcast %cst_113 : f32 to vector<2x32xf32>
    %276 = arith.mulf %275, %274 : vector<2x32xf32>
    %277 = vector.extract_strided_slice %260 {offsets = [0, 64], sizes = [2, 32], strides = [1, 1]} : vector<2x128xf32> to vector<2x32xf32>
    %278 = math.tanh %277 : vector<2x32xf32>
    %279 = vector.extract_strided_slice %260 {offsets = [0, 96], sizes = [2, 32], strides = [1, 1]} : vector<2x128xf32> to vector<2x32xf32>
    %cst_114 = arith.constant 5.000000e-01 : f32
    %280 = vector.broadcast %cst_114 : f32 to vector<2x32xf32>
    %281 = arith.mulf %280, %279 : vector<2x32xf32>
    %282 = math.tanh %281 : vector<2x32xf32>
    %cst_115 = arith.constant 1.000000e+00 : f32
    %283 = vector.broadcast %cst_115 : f32 to vector<2x32xf32>
    %284 = arith.addf %282, %283 : vector<2x32xf32>
    %cst_116 = arith.constant 5.000000e-01 : f32
    %285 = vector.broadcast %cst_116 : f32 to vector<2x32xf32>
    %286 = arith.mulf %285, %284 : vector<2x32xf32>
    %287 = arith.mulf %276, %217 : vector<2x32xf32>
    %288 = arith.mulf %268, %278 : vector<2x32xf32>
    %289 = arith.addf %287, %288 : vector<2x32xf32>
    %290 = math.tanh %289 : vector<2x32xf32>
    %291 = arith.mulf %286, %290 : vector<2x32xf32>
    %c6 = arith.constant 6 : index
    %c0_117 = arith.constant 0 : index
    %292 = vector.load %arg17[%c6, %c0_117] : memref<8x128xf32, #tpu.memory_space<vmem>>, vector<2x128xf32>
    %293 = arith.truncf %254 : vector<2x32xf32> to vector<2x32xbf16>
    %cst_118 = arith.constant dense<0.000000e+00> : vector<2x128xf32>
    %294 = tpu.matmul %293, %66, %cst_118 {dimension_numbers = #tpu.dot_dimension_numbers<[1], [0], [0], [1], [0, 0, 1, 1], [], []>} : vector<2x32xbf16>, vector<32x128xbf16>, vector<2x128xf32> -> vector<2x128xf32>
    %295 = arith.addf %292, %294 : vector<2x128xf32>
    %296 = vector.extract_strided_slice %295 {offsets = [0, 0], sizes = [2, 32], strides = [1, 1]} : vector<2x128xf32> to vector<2x32xf32>
    %cst_119 = arith.constant 5.000000e-01 : f32
    %297 = vector.broadcast %cst_119 : f32 to vector<2x32xf32>
    %298 = arith.mulf %297, %296 : vector<2x32xf32>
    %299 = math.tanh %298 : vector<2x32xf32>
    %cst_120 = arith.constant 1.000000e+00 : f32
    %300 = vector.broadcast %cst_120 : f32 to vector<2x32xf32>
    %301 = arith.addf %299, %300 : vector<2x32xf32>
    %cst_121 = arith.constant 5.000000e-01 : f32
    %302 = vector.broadcast %cst_121 : f32 to vector<2x32xf32>
    %303 = arith.mulf %302, %301 : vector<2x32xf32>
    %304 = vector.extract_strided_slice %295 {offsets = [0, 32], sizes = [2, 32], strides = [1, 1]} : vector<2x128xf32> to vector<2x32xf32>
    %cst_122 = arith.constant 5.000000e-01 : f32
    %305 = vector.broadcast %cst_122 : f32 to vector<2x32xf32>
    %306 = arith.mulf %305, %304 : vector<2x32xf32>
    %307 = math.tanh %306 : vector<2x32xf32>
    %cst_123 = arith.constant 1.000000e+00 : f32
    %308 = vector.broadcast %cst_123 : f32 to vector<2x32xf32>
    %309 = arith.addf %307, %308 : vector<2x32xf32>
    %cst_124 = arith.constant 5.000000e-01 : f32
    %310 = vector.broadcast %cst_124 : f32 to vector<2x32xf32>
    %311 = arith.mulf %310, %309 : vector<2x32xf32>
    %312 = vector.extract_strided_slice %295 {offsets = [0, 64], sizes = [2, 32], strides = [1, 1]} : vector<2x128xf32> to vector<2x32xf32>
    %313 = math.tanh %312 : vector<2x32xf32>
    %314 = vector.extract_strided_slice %295 {offsets = [0, 96], sizes = [2, 32], strides = [1, 1]} : vector<2x128xf32> to vector<2x32xf32>
    %cst_125 = arith.constant 5.000000e-01 : f32
    %315 = vector.broadcast %cst_125 : f32 to vector<2x32xf32>
    %316 = arith.mulf %315, %314 : vector<2x32xf32>
    %317 = math.tanh %316 : vector<2x32xf32>
    %cst_126 = arith.constant 1.000000e+00 : f32
    %318 = vector.broadcast %cst_126 : f32 to vector<2x32xf32>
    %319 = arith.addf %317, %318 : vector<2x32xf32>
    %cst_127 = arith.constant 5.000000e-01 : f32
    %320 = vector.broadcast %cst_127 : f32 to vector<2x32xf32>
    %321 = arith.mulf %320, %319 : vector<2x32xf32>
    %322 = arith.mulf %311, %252 : vector<2x32xf32>
    %323 = arith.mulf %303, %313 : vector<2x32xf32>
    %324 = arith.addf %322, %323 : vector<2x32xf32>
    %325 = math.tanh %324 : vector<2x32xf32>
    %326 = arith.mulf %321, %325 : vector<2x32xf32>
    %327 = arith.truncf %326 : vector<2x32xf32> to vector<2x32xbf16>
    %cst_128 = arith.constant dense<0.000000e+00> : vector<2x128xf32>
    %328 = tpu.matmul %327, %67, %cst_128 {dimension_numbers = #tpu.dot_dimension_numbers<[1], [0], [0], [1], [0, 0, 1, 1], [], []>} : vector<2x32xbf16>, vector<32x128xbf16>, vector<2x128xf32> -> vector<2x128xf32>
    %329 = arith.truncf %291 : vector<2x32xf32> to vector<2x32xbf16>
    %cst_129 = arith.constant dense<0.000000e+00> : vector<2x128xf32>
    %330 = tpu.matmul %329, %68, %cst_129 {dimension_numbers = #tpu.dot_dimension_numbers<[1], [0], [0], [1], [0, 0, 1, 1], [], []>} : vector<2x32xbf16>, vector<32x128xbf16>, vector<2x128xf32> -> vector<2x128xf32>
    %331 = arith.addf %328, %330 : vector<2x128xf32>
    %332 = arith.addf %331, %71 : vector<2x128xf32>
    %333 = vector.extract_strided_slice %332 {offsets = [0, 0], sizes = [2, 32], strides = [1, 1]} : vector<2x128xf32> to vector<2x32xf32>
    %cst_130 = arith.constant 5.000000e-01 : f32
    %334 = vector.broadcast %cst_130 : f32 to vector<2x32xf32>
    %335 = arith.mulf %334, %333 : vector<2x32xf32>
    %336 = math.tanh %335 : vector<2x32xf32>
    %cst_131 = arith.constant 1.000000e+00 : f32
    %337 = vector.broadcast %cst_131 : f32 to vector<2x32xf32>
    %338 = arith.addf %336, %337 : vector<2x32xf32>
    %cst_132 = arith.constant 5.000000e-01 : f32
    %339 = vector.broadcast %cst_132 : f32 to vector<2x32xf32>
    %340 = arith.mulf %339, %338 : vector<2x32xf32>
    %341 = vector.extract_strided_slice %332 {offsets = [0, 32], sizes = [2, 32], strides = [1, 1]} : vector<2x128xf32> to vector<2x32xf32>
    %cst_133 = arith.constant 5.000000e-01 : f32
    %342 = vector.broadcast %cst_133 : f32 to vector<2x32xf32>
    %343 = arith.mulf %342, %341 : vector<2x32xf32>
    %344 = math.tanh %343 : vector<2x32xf32>
    %cst_134 = arith.constant 1.000000e+00 : f32
    %345 = vector.broadcast %cst_134 : f32 to vector<2x32xf32>
    %346 = arith.addf %344, %345 : vector<2x32xf32>
    %cst_135 = arith.constant 5.000000e-01 : f32
    %347 = vector.broadcast %cst_135 : f32 to vector<2x32xf32>
    %348 = arith.mulf %347, %346 : vector<2x32xf32>
    %349 = vector.extract_strided_slice %332 {offsets = [0, 64], sizes = [2, 32], strides = [1, 1]} : vector<2x128xf32> to vector<2x32xf32>
    %350 = math.tanh %349 : vector<2x32xf32>
    %351 = vector.extract_strided_slice %332 {offsets = [0, 96], sizes = [2, 32], strides = [1, 1]} : vector<2x128xf32> to vector<2x32xf32>
    %cst_136 = arith.constant 5.000000e-01 : f32
    %352 = vector.broadcast %cst_136 : f32 to vector<2x32xf32>
    %353 = arith.mulf %352, %351 : vector<2x32xf32>
    %354 = math.tanh %353 : vector<2x32xf32>
    %cst_137 = arith.constant 1.000000e+00 : f32
    %355 = vector.broadcast %cst_137 : f32 to vector<2x32xf32>
    %356 = arith.addf %354, %355 : vector<2x32xf32>
    %cst_138 = arith.constant 5.000000e-01 : f32
    %357 = vector.broadcast %cst_138 : f32 to vector<2x32xf32>
    %358 = arith.mulf %357, %356 : vector<2x32xf32>
    %359 = arith.mulf %348, %289 : vector<2x32xf32>
    %360 = arith.mulf %340, %350 : vector<2x32xf32>
    %361 = arith.addf %359, %360 : vector<2x32xf32>
    %362 = math.tanh %361 : vector<2x32xf32>
    %363 = arith.mulf %358, %362 : vector<2x32xf32>
    %c0_139 = arith.constant 0 : index
    %c0_140 = arith.constant 0 : index
    %364 = vector.load %arg12[%c0_139, %c0_140] : memref<32x32xbf16, #tpu.memory_space<vmem>>, vector<32x32xbf16>
    %365 = arith.truncf %363 : vector<2x32xf32> to vector<2x32xbf16>
    %cst_141 = arith.constant dense<0.000000e+00> : vector<2x32xf32>
    %366 = tpu.matmul %365, %364, %cst_141 {dimension_numbers = #tpu.dot_dimension_numbers<[1], [0], [0], [1], [0, 0, 1, 1], [], []>} : vector<2x32xbf16>, vector<32x32xbf16>, vector<2x32xf32> -> vector<2x32xf32>
    %c0_142 = arith.constant 0 : index
    %c0_143 = arith.constant 0 : index
    %367 = vector.load %arg13[%c0_142, %c0_143] : memref<1x32xf32, #tpu.memory_space<vmem>>, vector<1x32xf32>
    %368 = vector.broadcast %367 : vector<1x32xf32> to vector<2x32xf32>
    %369 = arith.addf %366, %368 : vector<2x32xf32>
    %cst_144 = arith.constant 0.000000e+00 : f32
    %370 = vector.broadcast %cst_144 : f32 to vector<2x32xf32>
    %371 = arith.maximumf %369, %370 : vector<2x32xf32>
    %c0_145 = arith.constant 0 : index
    %c0_146 = arith.constant 0 : index
    %372 = vector.load %arg14[%c0_145, %c0_146] : memref<32x3xbf16, #tpu.memory_space<vmem>>, vector<32x3xbf16>
    %373 = arith.truncf %371 : vector<2x32xf32> to vector<2x32xbf16>
    %cst_147 = arith.constant dense<0.000000e+00> : vector<2x3xf32>
    %374 = tpu.matmul %373, %372, %cst_147 {dimension_numbers = #tpu.dot_dimension_numbers<[1], [0], [0], [1], [0, 0, 1, 1], [], []>} : vector<2x32xbf16>, vector<32x3xbf16>, vector<2x3xf32> -> vector<2x3xf32>
    %c0_148 = arith.constant 0 : index
    %c0_149 = arith.constant 0 : index
    %375 = vector.load %arg15[%c0_148, %c0_149] : memref<1x3xf32, #tpu.memory_space<vmem>>, vector<1x3xf32>
    %376 = vector.broadcast %375 : vector<1x3xf32> to vector<2x3xf32>
    %377 = arith.addf %374, %376 : vector<2x3xf32>
    %c0_150 = arith.constant 0 : index
    %c0_151 = arith.constant 0 : index
    %378 = vector.load %arg16[%c0_150, %c0_151] : memref<2x3xf32, #tpu.memory_space<vmem>>, vector<2x3xf32>
    tpu.vector_store %arg16[%c0_150, %c0_151], %377 {strides = array<i32>} : memref<2x3xf32, #tpu.memory_space<vmem>>, vector<2x3xf32>,
    return
  }
  func.func @transform_0(%arg0: i32) -> (i32, i32) {
    %c0_i32 = arith.constant 0 : i32
    %c0_i32_0 = arith.constant 0 : i32
    return %arg0, %c0_i32 : i32, i32
  }
  func.func @transform_1(%arg0: i32) -> (i32, i32, i32) {
    %c0_i32 = arith.constant 0 : i32
    %c0_i32_0 = arith.constant 0 : i32
    %c0_i32_1 = arith.constant 0 : i32
    %c0_i32_2 = arith.constant 0 : i32
    return %c0_i32, %c0_i32_0, %c0_i32_1 : i32, i32, i32
  }
  func.func @transform_2(%arg0: i32) -> (i32, i32) {
    %c0_i32 = arith.constant 0 : i32
    %c0_i32_0 = arith.constant 0 : i32
    %c0_i32_1 = arith.constant 0 : i32
    return %c0_i32, %c0_i32_0 : i32, i32
  }
  func.func @transform_3(%arg0: i32) -> (i32, i32, i32) {
    %c0_i32 = arith.constant 0 : i32
    %c0_i32_0 = arith.constant 0 : i32
    %c0_i32_1 = arith.constant 0 : i32
    %c0_i32_2 = arith.constant 0 : i32
    return %c0_i32, %c0_i32_0, %c0_i32_1 : i32, i32, i32
  }
  func.func @transform_4(%arg0: i32) -> (i32, i32) {
    %c0_i32 = arith.constant 0 : i32
    %c0_i32_0 = arith.constant 0 : i32
    %c0_i32_1 = arith.constant 0 : i32
    return %c0_i32, %c0_i32_0 : i32, i32
  }
  func.func @transform_5(%arg0: i32) -> (i32, i32) {
    %c0_i32 = arith.constant 0 : i32
    %c0_i32_0 = arith.constant 0 : i32
    %c0_i32_1 = arith.constant 0 : i32
    return %c0_i32, %c0_i32_0 : i32, i32
  }
  func.func @transform_6(%arg0: i32) -> (i32, i32) {
    %c0_i32 = arith.constant 0 : i32
    %c0_i32_0 = arith.constant 0 : i32
    %c0_i32_1 = arith.constant 0 : i32
    return %c0_i32, %c0_i32_0 : i32, i32
  }
  func.func @transform_7(%arg0: i32) -> (i32, i32) {
    %c0_i32 = arith.constant 0 : i32
    %c0_i32_0 = arith.constant 0 : i32
    %c0_i32_1 = arith.constant 0 : i32
    return %c0_i32, %c0_i32_0 : i32, i32
  }
  func.func @transform_8(%arg0: i32) -> (i32, i32) {
    %c0_i32 = arith.constant 0 : i32
    %c0_i32_0 = arith.constant 0 : i32
    %c0_i32_1 = arith.constant 0 : i32
    return %c0_i32, %c0_i32_0 : i32, i32
  }
  func.func @transform_9(%arg0: i32) -> (i32, i32) {
    %c0_i32 = arith.constant 0 : i32
    %c0_i32_0 = arith.constant 0 : i32
    %c0_i32_1 = arith.constant 0 : i32
    return %c0_i32, %c0_i32_0 : i32, i32
  }
  func.func @transform_10(%arg0: i32) -> (i32, i32) {
    %c0_i32 = arith.constant 0 : i32
    %c0_i32_0 = arith.constant 0 : i32
    %c0_i32_1 = arith.constant 0 : i32
    return %c0_i32, %c0_i32_0 : i32, i32
  }
  func.func @transform_11(%arg0: i32) -> (i32, i32) {
    %c0_i32 = arith.constant 0 : i32
    %c0_i32_0 = arith.constant 0 : i32
    %c0_i32_1 = arith.constant 0 : i32
    return %c0_i32, %c0_i32_0 : i32, i32
  }
  func.func @transform_12(%arg0: i32) -> (i32, i32) {
    %c0_i32 = arith.constant 0 : i32
    %c0_i32_0 = arith.constant 0 : i32
    %c0_i32_1 = arith.constant 0 : i32
    return %c0_i32, %c0_i32_0 : i32, i32
  }
  func.func @transform_13(%arg0: i32) -> (i32, i32) {
    %c0_i32 = arith.constant 0 : i32
    %c0_i32_0 = arith.constant 0 : i32
    %c0_i32_1 = arith.constant 0 : i32
    return %c0_i32, %c0_i32_0 : i32, i32
  }
  func.func @transform_14(%arg0: i32) -> (i32, i32) {
    %c0_i32 = arith.constant 0 : i32
    %c0_i32_0 = arith.constant 0 : i32
    %c0_i32_1 = arith.constant 0 : i32
    return %c0_i32, %c0_i32_0 : i32, i32
  }
  func.func @transform_15(%arg0: i32) -> (i32, i32) {
    %c0_i32 = arith.constant 0 : i32
    %c0_i32_0 = arith.constant 0 : i32
    return %arg0, %c0_i32 : i32, i32
  }
}

</mosaic_0001>

<llo_original>
// kernel: tpu_custom_call.1
$region0: #{tpu_custom_call.1}
  #allocation0 [shape = 'u32[]', space=smem, size = 0x4, offset = 0x4, fixed_abs, tag = 'smem constant byte address 0x4 - core index']
  #allocation1 [shape = 'u32[144,128]{1,0:T(1,128)}', space=vmem, size = 0x12000, scoped, tag = 'internal scratch']
  #allocation2 [shape = 'f32[8,128]{1,0:T(8,128)}', space=vmem, size = 0x1000, scoped, tag = 'scratch operand']
  %s0 = inlined_call_operand.vmem [shape: f32[32,4], index: 0, kind: input, shape index: {}]
  %s1 = inlined_call_operand.hbm [shape: bf16[3,4,8], index: 1, kind: input, shape index: {}]
  %s2 = inlined_call_operand.hbm [shape: f32[1,8], index: 2, kind: input, shape index: {}]
  %s3 = inlined_call_operand.hbm [shape: bf16[3,8,16], index: 3, kind: input, shape index: {}]
  %s4 = inlined_call_operand.hbm [shape: f32[1,16], index: 4, kind: input, shape index: {}]
  %s5 = inlined_call_operand.hbm [shape: bf16[16,128], index: 5, kind: input, shape index: {}]
  %s6 = inlined_call_operand.vmem [shape: bf16[32,128], index: 6, kind: input, shape index: {}]
  %s7 = inlined_call_operand.hbm [shape: f32[1,128], index: 7, kind: input, shape index: {}]
  %s8 = inlined_call_operand.vmem [shape: bf16[32,128], index: 8, kind: input, shape index: {}]
  %s9 = inlined_call_operand.vmem [shape: bf16[32,128], index: 9, kind: input, shape index: {}]
  %s10 = inlined_call_operand.vmem [shape: f32[1,128], index: 10, kind: input, shape index: {}]
  %s11 = inlined_call_operand.vmem [shape: bf16[32,32], index: 11, kind: input, shape index: {}]
  %s12 = inlined_call_operand.vmem [shape: f32[1,32], index: 12, kind: input, shape index: {}]
  %s13 = inlined_call_operand.vmem [shape: bf16[32,3], index: 13, kind: input, shape index: {}]
  %s14 = inlined_call_operand.vmem [shape: f32[1,3], index: 14, kind: input, shape index: {}]
  %s15 = inlined_call_operand.hbm [shape: f32[2,3], index: 15, kind: output, shape index: {}]
  %s16 = sld [smem:[#allocation0]]
  $region94: #{tpu_custom_call.1} parent=0
    _
  %s18 = ssub.s32 1, %s16
  %s19 = scalar_select 0, %s18, %s16
  $region1: #{tpu_custom_call.1} parent=0
    #allocation3 [shape = 'u8[3072]{0}', space=vmem, size = 0xc00, scoped, tag = 'input window, operand 1, single buffered']
    #allocation4 [shape = 's32[1]{0}', space=sflag, size = 0x4, scoped, tag = 'scoped memory for tpu_custom_call.1']
    #allocation5 [shape = 's32[1]{0}', space=sflag, size = 0x4, scoped, tag = 'scoped memory for tpu_custom_call.1']
    #allocation6 [shape = 'u8[512]{0}', space=vmem, size = 0x400, scoped, tag = 'input window, operand 2, single buffered']
    #allocation7 [shape = 's32[1]{0}', space=sflag, size = 0x4, scoped, tag = 'scoped memory for tpu_custom_call.1']
    #allocation8 [shape = 'u8[6144]{0}', space=vmem, size = 0x1800, scoped, tag = 'input window, operand 3, single buffered']
    #allocation9 [shape = 'u8[512]{0}', space=vmem, size = 0x400, scoped, tag = 'input window, operand 4, single buffered']
    #allocation10 [shape = 's32[1]{0}', space=sflag, size = 0x4, scoped, tag = 'scoped memory for tpu_custom_call.1']
    #allocation11 [shape = 'u8[4096]{0}', space=vmem, size = 0x1000, scoped, tag = 'input window, operand 5, single buffered']
    #allocation12 [shape = 'u8[512]{0}', space=vmem, size = 0x400, scoped, tag = 'input window, operand 7, single buffered']
    #allocation13 [shape = 's32[1]{0}', space=sflag, size = 0x4, scoped, tag = 'scoped memory for tpu_custom_call.1']
    #allocation14 [shape = 'u8[1024]{0}', space=vmem, size = 0x400, scoped, tag = 'output window, operand 0, single buffered']
    %20 = vsyncpa [#allocation4], 0
    %21 = vsyncpa [#allocation7], 0
    %22 = vsyncpa [#allocation10], 0
    %23 = vsyncpa [#allocation13], 0
    %24 = vsyncpa [#allocation5], 0
    // Predicated region
    $region2: #{tpu_custom_call.1} parent=1 // pred_check
      _
    $region3: #{tpu_custom_call.1} parent=1 // pred_check_branch
      %26 = sbr.rel (0) target = $region5
    $region4: #{tpu_custom_call.1} parent=1 // pred_region
      _
    $region5: #{tpu_custom_call.1} parent=1 // pred_fallthru
      _
    // Predicated region
    $region6: #{tpu_custom_call.1} parent=1 // pred_check
      _
    $region7: #{tpu_custom_call.1} parent=1 // pred_check_branch
      %28 = sbr.rel (0) target = $region9
    $region8: #{tpu_custom_call.1} parent=1 // pred_region
      %s30 = ssub.s32 96, 96
      %31 = vsyncadd [#allocation4], %s30
      %s32 = sshll.u32 [#allocation3], 4
      %s33 = int_to_ptr.vmem [resolvable:$true] %s32
      %38 = dma.hbm_to_vmem [thread:$0]  %s1, 96, %s33, [#allocation4], 32, 32, 2
    $region9: #{tpu_custom_call.1} parent=1 // pred_fallthru
      _
    // Predicated region
    $region10: #{tpu_custom_call.1} parent=1 // pred_check
      _
    $region11: #{tpu_custom_call.1} parent=1 // pred_check_branch
      %40 = sbr.rel (0) target = $region13
    $region12: #{tpu_custom_call.1} parent=1 // pred_region
      %s42 = ssub.s32 16, 16
      %43 = vsyncadd [#allocation7], %s42
      %s45 = sshll.u32 [#allocation6], 4
      %s46 = int_to_ptr.vmem [resolvable:$true] %s45
      %48 = dma.hbm_to_vmem [thread:$0]  %s2, 16, %s46, [#allocation7]
    $region13: #{tpu_custom_call.1} parent=1 // pred_fallthru
      _
    // Predicated region
    $region14: #{tpu_custom_call.1} parent=1 // pred_check
      _
    $region15: #{tpu_custom_call.1} parent=1 // pred_check_branch
      %50 = sbr.rel (0) target = $region17
    $region16: #{tpu_custom_call.1} parent=1 // pred_region
      %s52 = ssub.s32 192, 192
      %53 = vsyncadd [#allocation7], %s52
      %s54 = sshll.u32 [#allocation8], 4
      %s55 = int_to_ptr.vmem [resolvable:$true] %s54
      %60 = dma.hbm_to_vmem [thread:$0]  %s3, 192, %s55, [#allocation7], 64, 64, 4
    $region17: #{tpu_custom_call.1} parent=1 // pred_fallthru
      _
    // Predicated region
    $region18: #{tpu_custom_call.1} parent=1 // pred_check
      _
    $region19: #{tpu_custom_call.1} parent=1 // pred_check_branch
      %62 = sbr.rel (0) target = $region21
    $region20: #{tpu_custom_call.1} parent=1 // pred_region
      %s64 = ssub.s32 16, 16
      %65 = vsyncadd [#allocation10], %s64
      %s67 = sshll.u32 [#allocation9], 4
      %s68 = int_to_ptr.vmem [resolvable:$true] %s67
      %70 = dma.hbm_to_vmem [thread:$0]  %s4, 16, %s68, [#allocation10]
    $region21: #{tpu_custom_call.1} parent=1 // pred_fallthru
      _
    // Predicated region
    $region22: #{tpu_custom_call.1} parent=1 // pred_check
      _
    $region23: #{tpu_custom_call.1} parent=1 // pred_check_branch
      %72 = sbr.rel (0) target = $region25
    $region24: #{tpu_custom_call.1} parent=1 // pred_region
      %s74 = ssub.s32 128, 128
      %75 = vsyncadd [#allocation10], %s74
      %s76 = sshll.u32 [#allocation11], 4
      %s77 = int_to_ptr.vmem [resolvable:$true] %s76
      %82 = dma.hbm_to_vmem [thread:$0]  %s5, 128, %s77, [#allocation10], 64, 64, 4
    $region25: #{tpu_custom_call.1} parent=1 // pred_fallthru
      _
    // Predicated region
    $region26: #{tpu_custom_call.1} parent=1 // pred_check
      _
    $region27: #{tpu_custom_call.1} parent=1 // pred_check_branch
      %84 = sbr.rel (0) target = $region29
    $region28: #{tpu_custom_call.1} parent=1 // pred_region
      _
    $region29: #{tpu_custom_call.1} parent=1 // pred_fallthru
      _
    // Predicated region
    $region30: #{tpu_custom_call.1} parent=1 // pred_check
      _
    $region31: #{tpu_custom_call.1} parent=1 // pred_check_branch
      %86 = sbr.rel (0) target = $region33
    $region32: #{tpu_custom_call.1} parent=1 // pred_region
      %s88 = ssub.s32 16, 16
      %89 = vsyncadd [#allocation13], %s88
      %s91 = sshll.u32 [#allocation12], 4
      %s92 = int_to_ptr.vmem [resolvable:$true] %s91
      %94 = dma.hbm_to_vmem [thread:$0]  %s7, 16, %s92, [#allocation13]
    $region33: #{tpu_custom_call.1} parent=1 // pred_fallthru
      _
    // Predicated region
    $region34: #{tpu_custom_call.1} parent=1 // pred_check
      _
    $region35: #{tpu_custom_call.1} parent=1 // pred_check_branch
      %96 = sbr.rel (0) target = $region37
    $region36: #{tpu_custom_call.1} parent=1 // pred_region
      _
    $region37: #{tpu_custom_call.1} parent=1 // pred_fallthru
      _
    // Predicated region
    $region38: #{tpu_custom_call.1} parent=1 // pred_check
      _
    $region39: #{tpu_custom_call.1} parent=1 // pred_check_branch
      %98 = sbr.rel (0) target = $region41
    $region40: #{tpu_custom_call.1} parent=1 // pred_region
      _
    $region41: #{tpu_custom_call.1} parent=1 // pred_fallthru
      _
    // Predicated region
    $region42: #{tpu_custom_call.1} parent=1 // pred_check
      _
    $region43: #{tpu_custom_call.1} parent=1 // pred_check_branch
      %100 = sbr.rel (0) target = $region45
    $region44: #{tpu_custom_call.1} parent=1 // pred_region
      _
    $region45: #{tpu_custom_call.1} parent=1 // pred_fallthru
      _
    // Predicated region
    $region46: #{tpu_custom_call.1} parent=1 // pred_check
      _
    $region47: #{tpu_custom_call.1} parent=1 // pred_check_branch
      %102 = sbr.rel (0) target = $region49
    $region48: #{tpu_custom_call.1} parent=1 // pred_region
      _
    $region49: #{tpu_custom_call.1} parent=1 // pred_fallthru
      _
    // Predicated region
    $region50: #{tpu_custom_call.1} parent=1 // pred_check
      _
    $region51: #{tpu_custom_call.1} parent=1 // pred_check_branch
      %104 = sbr.rel (0) target = $region53
    $region52: #{tpu_custom_call.1} parent=1 // pred_region
      _
    $region53: #{tpu_custom_call.1} parent=1 // pred_fallthru
      _
    // Predicated region
    $region54: #{tpu_custom_call.1} parent=1 // pred_check
      _
    $region55: #{tpu_custom_call.1} parent=1 // pred_check_branch
      %106 = sbr.rel (0) target = $region57
    $region56: #{tpu_custom_call.1} parent=1 // pred_region
      _
    $region57: #{tpu_custom_call.1} parent=1 // pred_fallthru
      _
    // Predicated region
    $region58: #{tpu_custom_call.1} parent=1 // pred_check
      _
    $region59: #{tpu_custom_call.1} parent=1 // pred_check_branch
      %108 = sbr.rel (0) target = $region61
    $region60: #{tpu_custom_call.1} parent=1 // pred_region
      _
    $region61: #{tpu_custom_call.1} parent=1 // pred_fallthru
      _
    // Predicated region
    $region62: #{tpu_custom_call.1} parent=1 // pred_check
      _
    $region63: #{tpu_custom_call.1} parent=1 // pred_check_branch
      %110 = sbr.rel (0) target = $region65
    $region64: #{tpu_custom_call.1} parent=1 // pred_region
      %111 = dma.done [#allocation4], 96
    $region65: #{tpu_custom_call.1} parent=1 // pred_fallthru
      _
    // Predicated region
    $region66: #{tpu_custom_call.1} parent=1 // pred_check
      _
    $region67: #{tpu_custom_call.1} parent=1 // pred_check_branch
      %113 = sbr.rel (0) target = $region69
    $region68: #{tpu_custom_call.1} parent=1 // pred_region
      %114 = dma.done [#allocation7], 16
    $region69: #{tpu_custom_call.1} parent=1 // pred_fallthru
      _
    // Predicated region
    $region70: #{tpu_custom_call.1} parent=1 // pred_check
      _
    $region71: #{tpu_custom_call.1} parent=1 // pred_check_branch
      %116 = sbr.rel (0) target = $region73
    $region72: #{tpu_custom_call.1} parent=1 // pred_region
      %117 = dma.done [#allocation7], 192
    $region73: #{tpu_custom_call.1} parent=1 // pred_fallthru
      _
    // Predicated region
    $region74: #{tpu_custom_call.1} parent=1 // pred_check
      _
    $region75: #{tpu_custom_call.1} parent=1 // pred_check_branch
      %119 = sbr.rel (0) target = $region77
    $region76: #{tpu_custom_call.1} parent=1 // pred_region
      %120 = dma.done [#allocation10], 16
    $region77: #{tpu_custom_call.1} parent=1 // pred_fallthru
      _
    // Predicated region
    $region78: #{tpu_custom_call.1} parent=1 // pred_check
      _
    $region79: #{tpu_custom_call.1} parent=1 // pred_check_branch
      %122 = sbr.rel (0) target = $region81
    $region80: #{tpu_custom_call.1} parent=1 // pred_region
      %123 = dma.done [#allocation10], 128
    $region81: #{tpu_custom_call.1} parent=1 // pred_fallthru
      _
    // Predicated region
    $region82: #{tpu_custom_call.1} parent=1 // pred_check
      _
    $region83: #{tpu_custom_call.1} parent=1 // pred_check_branch
      %125 = sbr.rel (0) target = $region85
    $region84: #{tpu_custom_call.1} parent=1 // pred_region
      %126 = dma.done [#allocation13], 16
    $region85: #{tpu_custom_call.1} parent=1 // pred_fallthru
      _
    %v128 = vld [vmem:[%s0] sm:$0xff]
    %v129 = vld [vmem:[%s0 + $0x8] sm:$0xff]
    %v130 = vld [vmem:[%s0 + $0x10] sm:$0xff]
    %v131 = vld [vmem:[%s0 + $0x18] sm:$0xff]
    %vm136 = vcmask 1041408
    %v137 = vrot.slane %v128, 6
    %v138 = vrot.slane %v129, 6
    %v139 = vsel %vm136, %v137, %v138
    %v140 = vrot.slane %v130, 6
    %v141 = vsel %vm136, %v138, %v140
    %v142 = vrot.slane %v131, 6
    %v143 = vsel %vm136, %v140, %v142
    %v148 = vsel %vm136, 0.0, %v137
    %vm149 = vcmask 1045504
    %v150 = vrot.slane %v128, 2
    %v151 = vrot.slane %v129, 2
    %v152 = vsel %vm149, %v150, %v151
    %v153 = vrot.slane %v130, 2
    %v154 = vsel %vm149, %v151, %v153
    %v155 = vrot.slane %v131, 2
    %v156 = vsel %vm149, %v153, %v155
    %v161 = vsel %vm149, %v155, 0.0
    %v162 = vld [vmem:[#allocation3] sm:$0x3]
    %v163 = vpack.c.bf16 %v139, %v148
    %v164 = vpack.c.bf16 %v143, %v141
    %s165 = scalar_lea.vmem [#allocation3], 2
    %v166 = vld [vmem:[%s165] sm:$0x3]
    %v167 = vpack.c.bf16 %v129, %v128
    %v168 = vpack.c.bf16 %v131, %v130
    %vm169 = vcmask 31744
    %v171 = vsel %vm169, %v167, 0
    %v174 = vsel %vm169, %v168, 0
    %v177 = vsel %vm136, %v166, 0
    %179 = vmatprep.subr.bf16.mxu0 0
    %180 = vmatpush1.bf16.msra.mxu0 0
    %181 = vmatprep.subr.bf16.mxu0 0
    %182 = vmatpush1.bf16.msra.mxu0 0
    %183 = vmatprep.subr.bf16.mxu0 0
    %184 = vmatpush1.bf16.msra.mxu0 0
    %185 = vmatprep.subr.bf16.mxu0 0
    %186 = vmatpush1.bf16.msra.mxu0 0
    %187 = vmatprep.subr.bf16.mxu0 0
    %188 = vmatpush1.bf16.msra.mxu0 0
    %189 = vmatprep.subr.bf16.mxu0 0
    %190 = vmatpush1.bf16.msra.mxu0 0
    %191 = vmatprep.subr.bf16.mxu0 0
    %192 = vmatpush1.bf16.msra.mxu0 0
    %193 = vmatprep.subr.bf16.mxu0 0
    %194 = vmatpush1.bf16.msra.mxu0 %v177
    %195 = vmatprep.subr.bf16.mxu0 0
    %196 = vmatpush2.bf16.msra.mxu0 0
    %197 = vmatprep.subr.bf16.mxu0 0
    %198 = vmatpush2.bf16.msra.mxu0 0
    %199 = vmatprep.subr.bf16.mxu0 0
    %200 = vmatpush2.bf16.msra.mxu0 0
    %201 = vmatprep.subr.bf16.mxu0 0
    %202 = vmatpush2.bf16.msra.mxu0 0
    %203 = vmatprep.subr.bf16.mxu0 0
    %204 = vmatpush2.bf16.msra.mxu0 0
    %205 = vmatprep.subr.bf16.mxu0 0
    %206 = vmatpush2.bf16.msra.mxu0 0
    %207 = vmatprep.subr.bf16.mxu0 0
    %208 = vmatpush2.bf16.msra.mxu0 0
    %209 = vmatprep.subr.bf16.mxu0 0
    %210 = vmatpush2.bf16.msra.mxu0 0
    %211 = vmatprep.mubr.bf16.mxu0 0
    %212 = vmatmul.mubr.bf16.gmra.mxu0 %v171
    %v213 = vpop.f32.mrf.mxu0
    %v214 = vadd.f32 0.0, %v213
    %v215 = vpop.f32.mrf.mxu0
    %v216 = vpop.f32.mrf.mxu0
    %v217 = vadd.f32 0.0, %v216
    %v218 = vpop.f32.mrf.mxu0
    %219 = vmatprep.mubr.bf16.mxu0 0
    %220 = vmatmul.mubr.bf16.gmra.mxu0 %v174
    %v221 = vpop.f32.mrf.mxu0
    %v222 = vadd.f32 0.0, %v221
    %v223 = vpop.f32.mrf.mxu0
    %v224 = vpop.f32.mrf.mxu0
    %v225 = vadd.f32 0.0, %v224
    %v226 = vpop.f32.mrf.mxu0
    %227 = vdwg.mxu0
    %v229 = vsel %vm169, %v163, 0
    %v232 = vsel %vm169, %v164, 0
    %v235 = vsel %vm136, %v162, 0
    %237 = vmatprep.subr.bf16.mxu0 0
    %238 = vmatpush1.bf16.msra.mxu0 0
    %239 = vmatprep.subr.bf16.mxu0 0
    %240 = vmatpush1.bf16.msra.mxu0 0
    %241 = vmatprep.subr.bf16.mxu0 0
    %242 = vmatpush1.bf16.msra.mxu0 0
    %243 = vmatprep.subr.bf16.mxu0 0
    %244 = vmatpush1.bf16.msra.mxu0 0
    %245 = vmatprep.subr.bf16.mxu0 0
    %246 = vmatpush1.bf16.msra.mxu0 0
    %247 = vmatprep.subr.bf16.mxu0 0
    %248 = vmatpush1.bf16.msra.mxu0 0
    %249 = vmatprep.subr.bf16.mxu0 0
    %250 = vmatpush1.bf16.msra.mxu0 0
    %251 = vmatprep.subr.bf16.mxu0 0
    %252 = vmatpush1.bf16.msra.mxu0 %v235
    %253 = vmatprep.subr.bf16.mxu0 0
    %254 = vmatpush2.bf16.msra.mxu0 0
    %255 = vmatprep.subr.bf16.mxu0 0
    %256 = vmatpush2.bf16.msra.mxu0 0
    %257 = vmatprep.subr.bf16.mxu0 0
    %258 = vmatpush2.bf16.msra.mxu0 0
    %259 = vmatprep.subr.bf16.mxu0 0
    %260 = vmatpush2.bf16.msra.mxu0 0
    %261 = vmatprep.subr.bf16.mxu0 0
    %262 = vmatpush2.bf16.msra.mxu0 0
    %263 = vmatprep.subr.bf16.mxu0 0
    %264 = vmatpush2.bf16.msra.mxu0 0
    %265 = vmatprep.subr.bf16.mxu0 0
    %266 = vmatpush2.bf16.msra.mxu0 0
    %267 = vmatprep.subr.bf16.mxu0 0
    %268 = vmatpush2.bf16.msra.mxu0 0
    %269 = vmatprep.mubr.bf16.mxu0 0
    %270 = vmatmul.mubr.bf16.gmra.mxu0 %v229
    %v271 = vpop.f32.mrf.mxu0
    %v272 = vadd.f32 %v214, %v271
    %v273 = vpop.f32.mrf.mxu0
    %v274 = vpop.f32.mrf.mxu0
    %v275 = vadd.f32 %v217, %v274
    %v276 = vpop.f32.mrf.mxu0
    %277 = vmatprep.mubr.bf16.mxu0 0
    %278 = vmatmul.mubr.bf16.gmra.mxu0 %v232
    %v279 = vpop.f32.mrf.mxu0
    %v280 = vadd.f32 %v222, %v279
    %v281 = vpop.f32.mrf.mxu0
    %v282 = vpop.f32.mrf.mxu0
    %v283 = vadd.f32 %v225, %v282
    %v284 = vpop.f32.mrf.mxu0
    %285 = vdwg.mxu0
    %s286 = scalar_lea.vmem [#allocation3], 4
    %v287 = vld [vmem:[%s286] sm:$0x3]
    %v288 = vpack.c.bf16 %v154, %v152
    %v289 = vpack.c.bf16 %v161, %v156
    %v291 = vsel %vm169, %v288, 0
    %v294 = vsel %vm169, %v289, 0
    %v297 = vsel %vm136, %v287, 0
    %299 = vmatprep.subr.bf16.mxu0 0
    %300 = vmatpush1.bf16.msra.mxu0 0
    %301 = vmatprep.subr.bf16.mxu0 0
    %302 = vmatpush1.bf16.msra.mxu0 0
    %303 = vmatprep.subr.bf16.mxu0 0
    %304 = vmatpush1.bf16.msra.mxu0 0
    %305 = vmatprep.subr.bf16.mxu0 0
    %306 = vmatpush1.bf16.msra.mxu0 0
    %307 = vmatprep.subr.bf16.mxu0 0
    %308 = vmatpush1.bf16.msra.mxu0 0
    %309 = vmatprep.subr.bf16.mxu0 0
    %310 = vmatpush1.bf16.msra.mxu0 0
    %311 = vmatprep.subr.bf16.mxu0 0
    %312 = vmatpush1.bf16.msra.mxu0 0
    %313 = vmatprep.subr.bf16.mxu0 0
    %314 = vmatpush1.bf16.msra.mxu0 %v297
    %315 = vmatprep.subr.bf16.mxu0 0
    %316 = vmatpush2.bf16.msra.mxu0 0
    %317 = vmatprep.subr.bf16.mxu0 0
    %318 = vmatpush2.bf16.msra.mxu0 0
    %319 = vmatprep.subr.bf16.mxu0 0
    %320 = vmatpush2.bf16.msra.mxu0 0
    %321 = vmatprep.subr.bf16.mxu0 0
    %322 = vmatpush2.bf16.msra.mxu0 0
    %323 = vmatprep.subr.bf16.mxu0 0
    %324 = vmatpush2.bf16.msra.mxu0 0
    %325 = vmatprep.subr.bf16.mxu0 0
    %326 = vmatpush2.bf16.msra.mxu0 0
    %327 = vmatprep.subr.bf16.mxu0 0
    %328 = vmatpush2.bf16.msra.mxu0 0
    %329 = vmatprep.subr.bf16.mxu0 0
    %330 = vmatpush2.bf16.msra.mxu0 0
    %331 = vmatprep.mubr.bf16.mxu0 0
    %332 = vmatmul.mubr.bf16.gmra.mxu0 %v291
    %v333 = vpop.f32.mrf.mxu0
    %v334 = vadd.f32 0.0, %v333
    %v335 = vpop.f32.mrf.mxu0
    %v336 = vpop.f32.mrf.mxu0
    %v337 = vadd.f32 0.0, %v336
    %v338 = vpop.f32.mrf.mxu0
    %339 = vmatprep.mubr.bf16.mxu0 0
    %340 = vmatmul.mubr.bf16.gmra.mxu0 %v294
    %v341 = vpop.f32.mrf.mxu0
    %v342 = vadd.f32 0.0, %v341
    %v343 = vpop.f32.mrf.mxu0
    %v344 = vpop.f32.mrf.mxu0
    %v345 = vadd.f32 0.0, %v344
    %v346 = vpop.f32.mrf.mxu0
    %347 = vdwg.mxu0
    %v348 = vadd.f32 %v272, %v334
    %v349 = vadd.f32 %v275, %v337
    %v350 = vadd.f32 %v280, %v342
    %v351 = vadd.f32 %v283, %v345
    %v352 = vld [vmem:[#allocation6] sm:$0x1]
    %v354 = vlaneseq
    %v355 = vshrl.u32 %v354, 7
    %v356 = vsub.s32 0, %v355
    %v357 = vrot.slane %v352, %v356
    %v359 = vadd.f32 %v348, %v357
    %v360 = vadd.f32 %v349, %v357
    %v361 = vadd.f32 %v350, %v357
    %v362 = vadd.f32 %v351, %v357
    %v363 = vmax.f32 %v359, 0.0
    %v364 = vmax.f32 %v360, 0.0
    %v365 = vmax.f32 %v361, 0.0
    %v366 = vmax.f32 %v362, 0.0
    %v371 = vcombine.high %v363, %v363
    %v372 = vcombine.high %v364, %v364
    %v373 = vcombine.high %v365, %v365
    %v374 = vcombine.high %v366, %v366
    %v379 = vrot.slane %v363, 6
    %v380 = vrot.slane %v379, 4
    %v381 = vrot.slane %v371, 6
    %v382 = vrot.slane %v381, 4
    %v383 = vrot.slane %v364, 6
    %v384 = vrot.slane %v383, 4
    %v385 = vrot.slane %v372, 6
    %v386 = vrot.slane %v385, 4
    %v387 = vrot.slane %v365, 6
    %v388 = vrot.slane %v387, 4
    %v389 = vrot.slane %v373, 6
    %v390 = vrot.slane %v389, 4
    %v391 = vrot.slane %v366, 6
    %v392 = vrot.slane %v391, 4
    %v393 = vrot.slane %v374, 6
    %v394 = vrot.slane %v393, 4
    %v403 = vmax.f32 %v363, %v380
    %v404 = vmax.f32 %v371, %v382
    %v405 = vmax.f32 %v364, %v384
    %v406 = vmax.f32 %v372, %v386
    %v407 = vmax.f32 %v365, %v388
    %v408 = vmax.f32 %v373, %v390
    %v409 = vmax.f32 %v366, %v392
    %v410 = vmax.f32 %v374, %v394
    %v418 = vcombine.low %v403, %v403
    %v419 = vcombine.low %v404, %v405
    %v421 = vunpack.c.l.s4 1983009808
    %v422 = vunpack.c.0.s8 %v421
    %v423 = vlaneseq
    %v424 = vshrl.u32 %v423, 7
    %v425 = vsub.s32 %v422, %v424
    %v426 = vrot.slane %v418, %v425
    %v428 = vunpack.c.l.s4 1983009808
    %v429 = vunpack.c.0.s8 %v428
    %v430 = vlaneseq
    %v431 = vshrl.u32 %v430, 7
    %v432 = vsub.s32 %v429, %v431
    %v433 = vrot.slane %v419, %v432
    %v434 = vcombine.low %v426, %v433
    %v435 = vcombine.low %v406, %v407
    %v436 = vcombine.low %v408, %v409
    %v438 = vunpack.c.l.s4 1983009808
    %v439 = vunpack.c.0.s8 %v438
    %v440 = vlaneseq
    %v441 = vshrl.u32 %v440, 7
    %v442 = vsub.s32 %v439, %v441
    %v443 = vrot.slane %v435, %v442
    %v445 = vunpack.c.l.s4 1983009808
    %v446 = vunpack.c.0.s8 %v445
    %v447 = vlaneseq
    %v448 = vshrl.u32 %v447, 7
    %v449 = vsub.s32 %v446, %v448
    %v450 = vrot.slane %v436, %v449
    %v451 = vcombine.low %v443, %v450
    %v454 = vsel %vm136, 0.0, %v434
    %v456 = vcombine.low %v433, %v443
    %v458 = vunpack.c.l.s4 1983009808
    %v459 = vunpack.c.0.s8 %v458
    %v460 = vlaneseq
    %v461 = vshrl.u32 %v460, 7
    %v462 = vsub.s32 %v459, %v461
    %v463 = vrot.slane %v410, %v462
    %v464 = vcombine.low %v450, %v463
    %v467 = vsel %vm149, %v464, 0.0
    %v468 = vld [vmem:[#allocation8] sm:$0xf]
    %v469 = vpack.c.bf16 %v451, %v454
    %s470 = scalar_lea.vmem [#allocation8], 4
    %v471 = vld [vmem:[%s470] sm:$0xf]
    %v472 = vcombine.low %v403, %v404
    %v473 = vcombine.low %v405, %v406
    %v475 = vunpack.c.l.s4 1983009808
    %v476 = vunpack.c.0.s8 %v475
    %v477 = vlaneseq
    %v478 = vshrl.u32 %v477, 7
    %v479 = vsub.s32 %v476, %v478
    %v480 = vrot.slane %v472, %v479
    %v482 = vunpack.c.l.s4 1983009808
    %v483 = vunpack.c.0.s8 %v482
    %v484 = vlaneseq
    %v485 = vshrl.u32 %v484, 7
    %v486 = vsub.s32 %v483, %v485
    %v487 = vrot.slane %v473, %v486
    %v488 = vcombine.low %v480, %v487
    %v489 = vcombine.low %v407, %v408
    %v490 = vcombine.low %v409, %v410
    %v492 = vunpack.c.l.s4 1983009808
    %v493 = vunpack.c.0.s8 %v492
    %v494 = vlaneseq
    %v495 = vshrl.u32 %v494, 7
    %v496 = vsub.s32 %v493, %v495
    %v497 = vrot.slane %v489, %v496
    %v499 = vunpack.c.l.s4 1983009808
    %v500 = vunpack.c.0.s8 %v499
    %v501 = vlaneseq
    %v502 = vshrl.u32 %v501, 7
    %v503 = vsub.s32 %v500, %v502
    %v504 = vrot.slane %v490, %v503
    %v505 = vcombine.low %v497, %v504
    %v508 = vpack.c.bf16 %v505, %v488
    %vm509 = vcmask 64512
    %v511 = vsel %vm509, %v508, 0
    %vm513 = vcmask 1043456
    %v515 = vsel %vm513, %v471, 0
    %517 = vmatprep.subr.bf16.mxu0 0
    %518 = vmatpush1.bf16.msra.mxu0 0
    %519 = vmatprep.subr.bf16.mxu0 0
    %520 = vmatpush1.bf16.msra.mxu0 0
    %521 = vmatprep.subr.bf16.mxu0 0
    %522 = vmatpush1.bf16.msra.mxu0 0
    %523 = vmatprep.subr.bf16.mxu0 0
    %524 = vmatpush1.bf16.msra.mxu0 0
    %525 = vmatprep.subr.bf16.mxu0 0
    %526 = vmatpush1.bf16.msra.mxu0 0
    %527 = vmatprep.subr.bf16.mxu0 0
    %528 = vmatpush1.bf16.msra.mxu0 0
    %529 = vmatprep.subr.bf16.mxu0 0
    %530 = vmatpush1.bf16.msra.mxu0 0
    %531 = vmatprep.subr.bf16.mxu0 0
    %532 = vmatpush1.bf16.msra.mxu0 %v515
    %533 = vmatprep.subr.bf16.mxu0 0
    %534 = vmatpush2.bf16.msra.mxu0 0
    %535 = vmatprep.subr.bf16.mxu0 0
    %536 = vmatpush2.bf16.msra.mxu0 0
    %537 = vmatprep.subr.bf16.mxu0 0
    %538 = vmatpush2.bf16.msra.mxu0 0
    %539 = vmatprep.subr.bf16.mxu0 0
    %540 = vmatpush2.bf16.msra.mxu0 0
    %541 = vmatprep.subr.bf16.mxu0 0
    %542 = vmatpush2.bf16.msra.mxu0 0
    %543 = vmatprep.subr.bf16.mxu0 0
    %544 = vmatpush2.bf16.msra.mxu0 0
    %545 = vmatprep.subr.bf16.mxu0 0
    %546 = vmatpush2.bf16.msra.mxu0 0
    %547 = vmatprep.subr.bf16.mxu0 0
    %548 = vmatpush2.bf16.msra.mxu0 0
    %549 = vmatprep.mubr.bf16.mxu0 0
    %550 = vmatmul.mubr.bf16.gmra.mxu0 %v511
    %v551 = vpop.f32.mrf.mxu0
    %v552 = vadd.f32 0.0, %v551
    %v553 = vpop.f32.mrf.mxu0
    %v554 = vpop.f32.mrf.mxu0
    %v555 = vadd.f32 0.0, %v554
    %v556 = vpop.f32.mrf.mxu0
    %557 = vdwg.mxu0
    %v559 = vsel %vm509, %v469, 0
    %v562 = vsel %vm513, %v468, 0
    %564 = vmatprep.subr.bf16.mxu0 0
    %565 = vmatpush1.bf16.msra.mxu0 0
    %566 = vmatprep.subr.bf16.mxu0 0
    %567 = vmatpush1.bf16.msra.mxu0 0
    %568 = vmatprep.subr.bf16.mxu0 0
    %569 = vmatpush1.bf16.msra.mxu0 0
    %570 = vmatprep.subr.bf16.mxu0 0
    %571 = vmatpush1.bf16.msra.mxu0 0
    %572 = vmatprep.subr.bf16.mxu0 0
    %573 = vmatpush1.bf16.msra.mxu0 0
    %574 = vmatprep.subr.bf16.mxu0 0
    %575 = vmatpush1.bf16.msra.mxu0 0
    %576 = vmatprep.subr.bf16.mxu0 0
    %577 = vmatpush1.bf16.msra.mxu0 0
    %578 = vmatprep.subr.bf16.mxu0 0
    %579 = vmatpush1.bf16.msra.mxu0 %v562
    %580 = vmatprep.subr.bf16.mxu0 0
    %581 = vmatpush2.bf16.msra.mxu0 0
    %582 = vmatprep.subr.bf16.mxu0 0
    %583 = vmatpush2.bf16.msra.mxu0 0
    %584 = vmatprep.subr.bf16.mxu0 0
    %585 = vmatpush2.bf16.msra.mxu0 0
    %586 = vmatprep.subr.bf16.mxu0 0
    %587 = vmatpush2.bf16.msra.mxu0 0
    %588 = vmatprep.subr.bf16.mxu0 0
    %589 = vmatpush2.bf16.msra.mxu0 0
    %590 = vmatprep.subr.bf16.mxu0 0
    %591 = vmatpush2.bf16.msra.mxu0 0
    %592 = vmatprep.subr.bf16.mxu0 0
    %593 = vmatpush2.bf16.msra.mxu0 0
    %594 = vmatprep.subr.bf16.mxu0 0
    %595 = vmatpush2.bf16.msra.mxu0 0
    %596 = vmatprep.mubr.bf16.mxu0 0
    %597 = vmatmul.mubr.bf16.gmra.mxu0 %v559
    %v598 = vpop.f32.mrf.mxu0
    %v599 = vadd.f32 %v552, %v598
    %v600 = vpop.f32.mrf.mxu0
    %v601 = vpop.f32.mrf.mxu0
    %v602 = vadd.f32 %v555, %v601
    %v603 = vpop.f32.mrf.mxu0
    %604 = vdwg.mxu0
    %s605 = scalar_lea.vmem [#allocation8], 8
    %v606 = vld [vmem:[%s605] sm:$0xf]
    %v607 = vpack.c.bf16 %v467, %v456
    %v609 = vsel %vm509, %v607, 0
    %v612 = vsel %vm513, %v606, 0
    %614 = vmatprep.subr.bf16.mxu0 0
    %615 = vmatpush1.bf16.msra.mxu0 0
    %616 = vmatprep.subr.bf16.mxu0 0
    %617 = vmatpush1.bf16.msra.mxu0 0
    %618 = vmatprep.subr.bf16.mxu0 0
    %619 = vmatpush1.bf16.msra.mxu0 0
    %620 = vmatprep.subr.bf16.mxu0 0
    %621 = vmatpush1.bf16.msra.mxu0 0
    %622 = vmatprep.subr.bf16.mxu0 0
    %623 = vmatpush1.bf16.msra.mxu0 0
    %624 = vmatprep.subr.bf16.mxu0 0
    %625 = vmatpush1.bf16.msra.mxu0 0
    %626 = vmatprep.subr.bf16.mxu0 0
    %627 = vmatpush1.bf16.msra.mxu0 0
    %628 = vmatprep.subr.bf16.mxu0 0
    %629 = vmatpush1.bf16.msra.mxu0 %v612
    %630 = vmatprep.subr.bf16.mxu0 0
    %631 = vmatpush2.bf16.msra.mxu0 0
    %632 = vmatprep.subr.bf16.mxu0 0
    %633 = vmatpush2.bf16.msra.mxu0 0
    %634 = vmatprep.subr.bf16.mxu0 0
    %635 = vmatpush2.bf16.msra.mxu0 0
    %636 = vmatprep.subr.bf16.mxu0 0
    %637 = vmatpush2.bf16.msra.mxu0 0
    %638 = vmatprep.subr.bf16.mxu0 0
    %639 = vmatpush2.bf16.msra.mxu0 0
    %640 = vmatprep.subr.bf16.mxu0 0
    %641 = vmatpush2.bf16.msra.mxu0 0
    %642 = vmatprep.subr.bf16.mxu0 0
    %643 = vmatpush2.bf16.msra.mxu0 0
    %644 = vmatprep.subr.bf16.mxu0 0
    %645 = vmatpush2.bf16.msra.mxu0 0
    %646 = vmatprep.mubr.bf16.mxu0 0
    %647 = vmatmul.mubr.bf16.gmra.mxu0 %v609
    %v648 = vpop.f32.mrf.mxu0
    %v649 = vadd.f32 0.0, %v648
    %v650 = vpop.f32.mrf.mxu0
    %v651 = vpop.f32.mrf.mxu0
    %v652 = vadd.f32 0.0, %v651
    %v653 = vpop.f32.mrf.mxu0
    %654 = vdwg.mxu0
    %v655 = vadd.f32 %v599, %v649
    %v656 = vadd.f32 %v602, %v652
    %v657 = vld [vmem:[#allocation9] sm:$0x1]
    %v659 = vlaneseq
    %v660 = vshrl.u32 %v659, 7
    %v661 = vsub.s32 0, %v660
    %v662 = vrot.slane %v657, %v661
    %v664 = vadd.f32 %v655, %v662
    %v665 = vadd.f32 %v656, %v662
    %v666 = vmax.f32 %v664, 0.0
    %v667 = vmax.f32 %v665, 0.0
    %v670 = vcombine.high %v666, %v666
    %v671 = vcombine.high %v667, %v667
    %v674 = vrot.slane %v666, 6
    %v675 = vrot.slane %v674, 4
    %v676 = vrot.slane %v670, 6
    %v677 = vrot.slane %v676, 4
    %v678 = vrot.slane %v667, 6
    %v679 = vrot.slane %v678, 4
    %v680 = vrot.slane %v671, 6
    %v681 = vrot.slane %v680, 4
    %v686 = vmax.f32 %v666, %v675
    %v687 = vmax.f32 %v670, %v677
    %v688 = vmax.f32 %v667, %v679
    %v689 = vmax.f32 %v671, %v681
    %v690 = vld [vmem:[#allocation11] sm:$0xf]
    %v691 = vld [vmem:[#allocation11 + $0x4] sm:$0xf]
    %v696 = vcombine.low %v686, %v687
    %v697 = vcombine.low %v688, %v689
    %v699 = vunpack.c.l.s4 1983009808
    %v700 = vunpack.c.0.s8 %v699
    %v701 = vlaneseq
    %v702 = vshrl.u32 %v701, 7
    %v703 = vsub.s32 %v700, %v702
    %v704 = vrot.slane %v696, %v703
    %v706 = vunpack.c.l.s4 1983009808
    %v707 = vunpack.c.0.s8 %v706
    %v708 = vlaneseq
    %v709 = vshrl.u32 %v708, 7
    %v710 = vsub.s32 %v707, %v709
    %v711 = vrot.slane %v697, %v710
    %v712 = vcombine.low %v704, %v711
    %v714 = vpack.c.bf16 %v712, %v712
    %v715 = vld [vmem:[#allocation12] sm:$0x1]
    %v717 = vlaneseq
    %v718 = vshrl.u32 %v717, 7
    %v719 = vsub.s32 0, %v718
    %v720 = vrot.slane %v715, %v719
    %v724 = vunpack.c.l.b16 %v690
    %v725 = vunpack.c.l.b16 %v691
    %v726 = vpack.c.b16 %v725, %v724
    %vm728 = vcmask 130048
    %v730 = vsel %vm728, %v714, 0
    %732 = vmatprep.subr.bf16.mxu0 0
    %733 = vmatpush1.bf16.msra.mxu0 0
    %734 = vmatprep.subr.bf16.mxu0 0
    %735 = vmatpush1.bf16.msra.mxu0 0
    %736 = vmatprep.subr.bf16.mxu0 0
    %737 = vmatpush1.bf16.msra.mxu0 0
    %738 = vmatprep.subr.bf16.mxu0 0
    %739 = vmatpush1.bf16.msra.mxu0 0
    %740 = vmatprep.subr.bf16.mxu0 0
    %741 = vmatpush1.bf16.msra.mxu0 0
    %742 = vmatprep.subr.bf16.mxu0 0
    %743 = vmatpush1.bf16.msra.mxu0 0
    %744 = vmatprep.subr.bf16.mxu0 0
    %745 = vmatpush1.bf16.msra.mxu0 0
    %746 = vmatprep.subr.bf16.mxu0 0
    %747 = vmatpush1.bf16.msra.mxu0 %v726
    %748 = vmatprep.subr.bf16.mxu0 0
    %749 = vmatpush2.bf16.msra.mxu0 0
    %750 = vmatprep.subr.bf16.mxu0 0
    %751 = vmatpush2.bf16.msra.mxu0 0
    %752 = vmatprep.subr.bf16.mxu0 0
    %753 = vmatpush2.bf16.msra.mxu0 0
    %754 = vmatprep.subr.bf16.mxu0 0
    %755 = vmatpush2.bf16.msra.mxu0 0
    %756 = vmatprep.subr.bf16.mxu0 0
    %757 = vmatpush2.bf16.msra.mxu0 0
    %758 = vmatprep.subr.bf16.mxu0 0
    %759 = vmatpush2.bf16.msra.mxu0 0
    %760 = vmatprep.subr.bf16.mxu0 0
    %761 = vmatpush2.bf16.msra.mxu0 0
    %762 = vmatprep.subr.bf16.mxu0 0
    %763 = vmatpush2.bf16.msra.mxu0 0
    %764 = vmatprep.mubr.bf16.mxu0 0
    %765 = vmatmul.mubr.bf16.gmra.mxu0 %v730
    %v766 = vpop.f32.mrf.mxu0
    %v767 = vadd.f32 %v720, %v766
    %v768 = vpop.f32.mrf.mxu0
    %v769 = vpop.f32.mrf.mxu0
    %v770 = vpop.f32.mrf.mxu0
    %771 = vdwg.mxu0
    %772 = vst [vmem:[#allocation2] sm:$0xff] %v767
    %v773 = vld [vmem:[%s6] sm:$0xf]
    %v774 = vld [vmem:[%s6 + $0x4] sm:$0xf]
    %v775 = vld [vmem:[%s6 + $0x8] sm:$0xf]
    %v776 = vld [vmem:[%s6 + $0xc] sm:$0xf]
    %v777 = vld [vmem:[%s8] sm:$0xf]
    %v778 = vld [vmem:[%s8 + $0x4] sm:$0xf]
    %v779 = vld [vmem:[%s8 + $0x8] sm:$0xf]
    %v780 = vld [vmem:[%s8 + $0xc] sm:$0xf]
    %v781 = vld [vmem:[%s9] sm:$0xf]
    %v782 = vld [vmem:[%s9 + $0x4] sm:$0xf]
    %v783 = vld [vmem:[%s9 + $0x8] sm:$0xf]
    %v784 = vld [vmem:[%s9 + $0xc] sm:$0xf]
    %v785 = vld [vmem:[%s10] sm:$0x1]
    %v787 = vlaneseq
    %v788 = vshrl.u32 %v787, 7
    %v789 = vsub.s32 0, %v788
    %v790 = vrot.slane %v785, %v789
    %v792 = vld [vmem:[#allocation2] sm:$0x3]
    %v797 = vunpack.c.l.b16 %v773
    %v798 = vunpack.c.l.b16 %v774
    %v799 = vunpack.c.l.b16 %v775
    %v800 = vunpack.c.l.b16 %v776
    %v801 = vpack.c.b16 %v798, %v797
    %v802 = vpack.c.b16 %v800, %v799
    %vm805 = vcmask 261120
    %v807 = vsel %vm805, 0, 0
    %809 = vmatprep.subr.bf16.mxu0 0
    %810 = vmatpush1.bf16.msra.mxu0 0
    %811 = vmatprep.subr.bf16.mxu0 0
    %812 = vmatpush1.bf16.msra.mxu0 0
    %813 = vmatprep.subr.bf16.mxu0 0
    %814 = vmatpush1.bf16.msra.mxu0 0
    %815 = vmatprep.subr.bf16.mxu0 0
    %816 = vmatpush1.bf16.msra.mxu0 0
    %817 = vmatprep.subr.bf16.mxu0 0
    %818 = vmatpush1.bf16.msra.mxu0 0
    %819 = vmatprep.subr.bf16.mxu0 0
    %820 = vmatpush1.bf16.msra.mxu0 0
    %821 = vmatprep.subr.bf16.mxu0 0
    %822 = vmatpush1.bf16.msra.mxu0 %v802
    %823 = vmatprep.subr.bf16.mxu0 0
    %824 = vmatpush1.bf16.msra.mxu0 %v801
    %825 = vmatprep.subr.bf16.mxu0 0
    %826 = vmatpush2.bf16.msra.mxu0 0
    %827 = vmatprep.subr.bf16.mxu0 0
    %828 = vmatpush2.bf16.msra.mxu0 0
    %829 = vmatprep.subr.bf16.mxu0 0
    %830 = vmatpush2.bf16.msra.mxu0 0
    %831 = vmatprep.subr.bf16.mxu0 0
    %832 = vmatpush2.bf16.msra.mxu0 0
    %833 = vmatprep.subr.bf16.mxu0 0
    %834 = vmatpush2.bf16.msra.mxu0 0
    %835 = vmatprep.subr.bf16.mxu0 0
    %836 = vmatpush2.bf16.msra.mxu0 0
    %837 = vmatprep.subr.bf16.mxu0 0
    %838 = vmatpush2.bf16.msra.mxu0 0
    %839 = vmatprep.subr.bf16.mxu0 0
    %840 = vmatpush2.bf16.msra.mxu0 0
    %841 = vmatprep.mubr.bf16.mxu0 0
    %842 = vmatmul.mubr.bf16.gmra.mxu0 %v807
    %v843 = vpop.f32.mrf.mxu0
    %v844 = vadd.f32 0.0, %v843
    %v845 = vpop.f32.mrf.mxu0
    %v846 = vpop.f32.mrf.mxu0
    %v847 = vpop.f32.mrf.mxu0
    %848 = vdwg.mxu0
    %v849 = vadd.f32 %v792, %v844
    %v850 = vmul.f32 %v849, 0.5
    %v851 = vtanh.pop %v850
    %v852 = vadd.f32 %v851, 1.0
    %v853 = vmul.f32 %v852, 0.5
    %v854 = vtanh.pop %v849
    %v855 = vmul.f32 %v853, 0.0
    %857 = vrot.lane.b32.xlu0 %v854, 64
    %v858 = vpop.permute.xlu0 %857
    %v860 = vmul.f32 %v853, %v858
    %862 = vrot.lane.b32.xlu0 %v860, 32
    %v863 = vpop.permute.xlu0 %862
    %v865 = vadd.f32 %v855, %v863
    %v866 = vtanh.pop %v865
    %868 = vrot.lane.b32.xlu0 %v866, 64
    %v869 = vpop.permute.xlu0 %868
    %v871 = vmul.f32 %v853, %v869
    %v872 = vpack.c.bf16 %v871, %v871
    %v877 = vunpack.c.l.b16 %v781
    %v878 = vunpack.c.l.b16 %v782
    %v879 = vunpack.c.l.b16 %v783
    %v880 = vunpack.c.l.b16 %v784
    %v881 = vpack.c.b16 %v878, %v877
    %v882 = vpack.c.b16 %v880, %v879
    %885 = vmatprep.subr.bf16.mxu0 0
    %886 = vmatpush1.bf16.msra.mxu0 0
    %887 = vmatprep.subr.bf16.mxu0 0
    %888 = vmatpush1.bf16.msra.mxu0 0
    %889 = vmatprep.subr.bf16.mxu0 0
    %890 = vmatpush1.bf16.msra.mxu0 0
    %891 = vmatprep.subr.bf16.mxu0 0
    %892 = vmatpush1.bf16.msra.mxu0 0
    %893 = vmatprep.subr.bf16.mxu0 0
    %894 = vmatpush1.bf16.msra.mxu0 0
    %895 = vmatprep.subr.bf16.mxu0 0
    %896 = vmatpush1.bf16.msra.mxu0 0
    %897 = vmatprep.subr.bf16.mxu0 0
    %898 = vmatpush1.bf16.msra.mxu0 %v882
    %899 = vmatprep.subr.bf16.mxu0 0
    %900 = vmatpush1.bf16.msra.mxu0 %v881
    %901 = vmatprep.subr.bf16.mxu0 0
    %902 = vmatpush2.bf16.msra.mxu0 0
    %903 = vmatprep.subr.bf16.mxu0 0
    %904 = vmatpush2.bf16.msra.mxu0 0
    %905 = vmatprep.subr.bf16.mxu0 0
    %906 = vmatpush2.bf16.msra.mxu0 0
    %907 = vmatprep.subr.bf16.mxu0 0
    %908 = vmatpush2.bf16.msra.mxu0 0
    %909 = vmatprep.subr.bf16.mxu0 0
    %910 = vmatpush2.bf16.msra.mxu0 0
    %911 = vmatprep.subr.bf16.mxu0 0
    %912 = vmatpush2.bf16.msra.mxu0 0
    %913 = vmatprep.subr.bf16.mxu0 0
    %914 = vmatpush2.bf16.msra.mxu0 0
    %915 = vmatprep.subr.bf16.mxu0 0
    %916 = vmatpush2.bf16.msra.mxu0 0
    %917 = vmatprep.mubr.bf16.mxu0 0
    %918 = vmatmul.mubr.bf16.gmra.mxu0 %v807
    %v919 = vpop.f32.mrf.mxu0
    %v920 = vadd.f32 0.0, %v919
    %v921 = vpop.f32.mrf.mxu0
    %v922 = vpop.f32.mrf.mxu0
    %v923 = vpop.f32.mrf.mxu0
    %924 = vdwg.mxu0
    %926 = vrot.lane.b32.xlu0 %v872, 32
    %v927 = vpop.permute.xlu0 %926
    %v932 = vunpack.c.l.b16 %v777
    %v933 = vunpack.c.l.b16 %v778
    %v934 = vunpack.c.l.b16 %v779
    %v935 = vunpack.c.l.b16 %v780
    %v936 = vpack.c.b16 %v933, %v932
    %v937 = vpack.c.b16 %v935, %v934
    %v941 = vsel %vm805, %v927, 0
    %943 = vmatprep.subr.bf16.mxu0 0
    %944 = vmatpush1.bf16.msra.mxu0 0
    %945 = vmatprep.subr.bf16.mxu0 0
    %946 = vmatpush1.bf16.msra.mxu0 0
    %947 = vmatprep.subr.bf16.mxu0 0
    %948 = vmatpush1.bf16.msra.mxu0 0
    %949 = vmatprep.subr.bf16.mxu0 0
    %950 = vmatpush1.bf16.msra.mxu0 0
    %951 = vmatprep.subr.bf16.mxu0 0
    %952 = vmatpush1.bf16.msra.mxu0 0
    %953 = vmatprep.subr.bf16.mxu0 0
    %954 = vmatpush1.bf16.msra.mxu0 0
    %955 = vmatprep.subr.bf16.mxu0 0
    %956 = vmatpush1.bf16.msra.mxu0 %v937
    %957 = vmatprep.subr.bf16.mxu0 0
    %958 = vmatpush1.bf16.msra.mxu0 %v936
    %959 = vmatprep.subr.bf16.mxu0 0
    %960 = vmatpush2.bf16.msra.mxu0 0
    %961 = vmatprep.subr.bf16.mxu0 0
    %962 = vmatpush2.bf16.msra.mxu0 0
    %963 = vmatprep.subr.bf16.mxu0 0
    %964 = vmatpush2.bf16.msra.mxu0 0
    %965 = vmatprep.subr.bf16.mxu0 0
    %966 = vmatpush2.bf16.msra.mxu0 0
    %967 = vmatprep.subr.bf16.mxu0 0
    %968 = vmatpush2.bf16.msra.mxu0 0
    %969 = vmatprep.subr.bf16.mxu0 0
    %970 = vmatpush2.bf16.msra.mxu0 0
    %971 = vmatprep.subr.bf16.mxu0 0
    %972 = vmatpush2.bf16.msra.mxu0 0
    %973 = vmatprep.subr.bf16.mxu0 0
    %974 = vmatpush2.bf16.msra.mxu0 0
    %975 = vmatprep.mubr.bf16.mxu0 0
    %976 = vmatmul.mubr.bf16.gmra.mxu0 %v941
    %v977 = vpop.f32.mrf.mxu0
    %v978 = vadd.f32 %v920, %v977
    %v979 = vpop.f32.mrf.mxu0
    %v980 = vpop.f32.mrf.mxu0
    %v981 = vpop.f32.mrf.mxu0
    %982 = vdwg.mxu0
    %v983 = vadd.f32 %v978, %v790
    %v984 = vmul.f32 %v983, 0.5
    %v985 = vtanh.pop %v984
    %v986 = vadd.f32 %v985, 1.0
    %v987 = vmul.f32 %v986, 0.5
    %v988 = vtanh.pop %v983
    %v989 = vmul.f32 %v987, 0.0
    %991 = vrot.lane.b32.xlu0 %v988, 64
    %v992 = vpop.permute.xlu0 %991
    %v994 = vmul.f32 %v987, %v992
    %996 = vrot.lane.b32.xlu0 %v994, 32
    %v997 = vpop.permute.xlu0 %996
    %v999 = vadd.f32 %v989, %v997
    %v1000 = vtanh.pop %v999
    %1002 = vrot.lane.b32.xlu0 %v1000, 64
    %v1003 = vpop.permute.xlu0 %1002
    %v1005 = vmul.f32 %v987, %v1003
    %v1006 = vld [vmem:[#allocation2 + $0x2] sm:$0x3]
    %1007 = vmatprep.subr.bf16.mxu0 0
    %1008 = vmatpush1.bf16.msra.mxu0 0
    %1009 = vmatprep.subr.bf16.mxu0 0
    %1010 = vmatpush1.bf16.msra.mxu0 0
    %1011 = vmatprep.subr.bf16.mxu0 0
    %1012 = vmatpush1.bf16.msra.mxu0 0
    %1013 = vmatprep.subr.bf16.mxu0 0
    %1014 = vmatpush1.bf16.msra.mxu0 0
    %1015 = vmatprep.subr.bf16.mxu0 0
    %1016 = vmatpush1.bf16.msra.mxu0 0
    %1017 = vmatprep.subr.bf16.mxu0 0
    %1018 = vmatpush1.bf16.msra.mxu0 0
    %1019 = vmatprep.subr.bf16.mxu0 0
    %1020 = vmatpush1.bf16.msra.mxu0 %v802
    %1021 = vmatprep.subr.bf16.mxu0 0
    %1022 = vmatpush1.bf16.msra.mxu0 %v801
    %1023 = vmatprep.subr.bf16.mxu0 0
    %1024 = vmatpush2.bf16.msra.mxu0 0
    %1025 = vmatprep.subr.bf16.mxu0 0
    %1026 = vmatpush2.bf16.msra.mxu0 0
    %1027 = vmatprep.subr.bf16.mxu0 0
    %1028 = vmatpush2.bf16.msra.mxu0 0
    %1029 = vmatprep.subr.bf16.mxu0 0
    %1030 = vmatpush2.bf16.msra.mxu0 0
    %1031 = vmatprep.subr.bf16.mxu0 0
    %1032 = vmatpush2.bf16.msra.mxu0 0
    %1033 = vmatprep.subr.bf16.mxu0 0
    %1034 = vmatpush2.bf16.msra.mxu0 0
    %1035 = vmatprep.subr.bf16.mxu0 0
    %1036 = vmatpush2.bf16.msra.mxu0 0
    %1037 = vmatprep.subr.bf16.mxu0 0
    %1038 = vmatpush2.bf16.msra.mxu0 0
    %1039 = vmatprep.mubr.bf16.mxu0 0
    %1040 = vmatmul.mubr.bf16.gmra.mxu0 %v941
    %v1041 = vpop.f32.mrf.mxu0
    %v1042 = vadd.f32 0.0, %v1041
    %v1043 = vpop.f32.mrf.mxu0
    %v1044 = vpop.f32.mrf.mxu0
    %v1045 = vpop.f32.mrf.mxu0
    %1046 = vdwg.mxu0
    %v1047 = vadd.f32 %v1006, %v1042
    %v1048 = vmul.f32 %v1047, 0.5
    %v1049 = vtanh.pop %v1048
    %v1050 = vadd.f32 %v1049, 1.0
    %v1051 = vmul.f32 %v1050, 0.5
    %v1052 = vtanh.pop %v1047
    %v1053 = vmul.f32 %v1051, %v865
    %1055 = vrot.lane.b32.xlu0 %v1052, 64
    %v1056 = vpop.permute.xlu0 %1055
    %v1058 = vmul.f32 %v1051, %v1056
    %1060 = vrot.lane.b32.xlu0 %v1058, 32
    %v1061 = vpop.permute.xlu0 %1060
    %v1063 = vadd.f32 %v1053, %v1061
    %v1064 = vtanh.pop %v1063
    %1066 = vrot.lane.b32.xlu0 %v1064, 64
    %v1067 = vpop.permute.xlu0 %1066
    %v1069 = vmul.f32 %v1051, %v1067
    %v1070 = vpack.c.bf16 %v1069, %v1069
    %v1071 = vpack.c.bf16 %v1005, %v1005
    %1073 = vrot.lane.b32.xlu0 %v1071, 32
    %v1074 = vpop.permute.xlu0 %1073
    %v1076 = vsel %vm805, %v1074, 0
    %1078 = vmatprep.subr.bf16.mxu0 0
    %1079 = vmatpush1.bf16.msra.mxu0 0
    %1080 = vmatprep.subr.bf16.mxu0 0
    %1081 = vmatpush1.bf16.msra.mxu0 0
    %1082 = vmatprep.subr.bf16.mxu0 0
    %1083 = vmatpush1.bf16.msra.mxu0 0
    %1084 = vmatprep.subr.bf16.mxu0 0
    %1085 = vmatpush1.bf16.msra.mxu0 0
    %1086 = vmatprep.subr.bf16.mxu0 0
    %1087 = vmatpush1.bf16.msra.mxu0 0
    %1088 = vmatprep.subr.bf16.mxu0 0
    %1089 = vmatpush1.bf16.msra.mxu0 0
    %1090 = vmatprep.subr.bf16.mxu0 0
    %1091 = vmatpush1.bf16.msra.mxu0 %v882
    %1092 = vmatprep.subr.bf16.mxu0 0
    %1093 = vmatpush1.bf16.msra.mxu0 %v881
    %1094 = vmatprep.subr.bf16.mxu0 0
    %1095 = vmatpush2.bf16.msra.mxu0 0
    %1096 = vmatprep.subr.bf16.mxu0 0
    %1097 = vmatpush2.bf16.msra.mxu0 0
    %1098 = vmatprep.subr.bf16.mxu0 0
    %1099 = vmatpush2.bf16.msra.mxu0 0
    %1100 = vmatprep.subr.bf16.mxu0 0
    %1101 = vmatpush2.bf16.msra.mxu0 0
    %1102 = vmatprep.subr.bf16.mxu0 0
    %1103 = vmatpush2.bf16.msra.mxu0 0
    %1104 = vmatprep.subr.bf16.mxu0 0
    %1105 = vmatpush2.bf16.msra.mxu0 0
    %1106 = vmatprep.subr.bf16.mxu0 0
    %1107 = vmatpush2.bf16.msra.mxu0 0
    %1108 = vmatprep.subr.bf16.mxu0 0
    %1109 = vmatpush2.bf16.msra.mxu0 0
    %1110 = vmatprep.mubr.bf16.mxu0 0
    %1111 = vmatmul.mubr.bf16.gmra.mxu0 %v1076
    %v1112 = vpop.f32.mrf.mxu0
    %v1113 = vadd.f32 0.0, %v1112
    %v1114 = vpop.f32.mrf.mxu0
    %v1115 = vpop.f32.mrf.mxu0
    %v1116 = vpop.f32.mrf.mxu0
    %1117 = vdwg.mxu0
    %1119 = vrot.lane.b32.xlu0 %v1070, 32
    %v1120 = vpop.permute.xlu0 %1119
    %v1122 = vsel %vm805, %v1120, 0
    %1124 = vmatprep.subr.bf16.mxu0 0
    %1125 = vmatpush1.bf16.msra.mxu0 0
    %1126 = vmatprep.subr.bf16.mxu0 0
    %1127 = vmatpush1.bf16.msra.mxu0 0
    %1128 = vmatprep.subr.bf16.mxu0 0
    %1129 = vmatpush1.bf16.msra.mxu0 0
    %1130 = vmatprep.subr.bf16.mxu0 0
    %1131 = vmatpush1.bf16.msra.mxu0 0
    %1132 = vmatprep.subr.bf16.mxu0 0
    %1133 = vmatpush1.bf16.msra.mxu0 0
    %1134 = vmatprep.subr.bf16.mxu0 0
    %1135 = vmatpush1.bf16.msra.mxu0 0
    %1136 = vmatprep.subr.bf16.mxu0 0
    %1137 = vmatpush1.bf16.msra.mxu0 %v937
    %1138 = vmatprep.subr.bf16.mxu0 0
    %1139 = vmatpush1.bf16.msra.mxu0 %v936
    %1140 = vmatprep.subr.bf16.mxu0 0
    %1141 = vmatpush2.bf16.msra.mxu0 0
    %1142 = vmatprep.subr.bf16.mxu0 0
    %1143 = vmatpush2.bf16.msra.mxu0 0
    %1144 = vmatprep.subr.bf16.mxu0 0
    %1145 = vmatpush2.bf16.msra.mxu0 0
    %1146 = vmatprep.subr.bf16.mxu0 0
    %1147 = vmatpush2.bf16.msra.mxu0 0
    %1148 = vmatprep.subr.bf16.mxu0 0
    %1149 = vmatpush2.bf16.msra.mxu0 0
    %1150 = vmatprep.subr.bf16.mxu0 0
    %1151 = vmatpush2.bf16.msra.mxu0 0
    %1152 = vmatprep.subr.bf16.mxu0 0
    %1153 = vmatpush2.bf16.msra.mxu0 0
    %1154 = vmatprep.subr.bf16.mxu0 0
    %1155 = vmatpush2.bf16.msra.mxu0 0
    %1156 = vmatprep.mubr.bf16.mxu0 0
    %1157 = vmatmul.mubr.bf16.gmra.mxu0 %v1122
    %v1158 = vpop.f32.mrf.mxu0
    %v1159 = vadd.f32 %v1113, %v1158
    %v1160 = vpop.f32.mrf.mxu0
    %v1161 = vpop.f32.mrf.mxu0
    %v1162 = vpop.f32.mrf.mxu0
    %1163 = vdwg.mxu0
    %v1164 = vadd.f32 %v1159, %v790
    %v1165 = vmul.f32 %v1164, 0.5
    %v1166 = vtanh.pop %v1165
    %v1167 = vadd.f32 %v1166, 1.0
    %v1168 = vmul.f32 %v1167, 0.5
    %v1169 = vtanh.pop %v1164
    %v1170 = vmul.f32 %v1168, %v999
    %1172 = vrot.lane.b32.xlu0 %v1169, 64
    %v1173 = vpop.permute.xlu0 %1172
    %v1175 = vmul.f32 %v1168, %v1173
    %1177 = vrot.lane.b32.xlu0 %v1175, 32
    %v1178 = vpop.permute.xlu0 %1177
    %v1180 = vadd.f32 %v1170, %v1178
    %v1181 = vtanh.pop %v1180
    %1183 = vrot.lane.b32.xlu0 %v1181, 64
    %v1184 = vpop.permute.xlu0 %1183
    %v1186 = vmul.f32 %v1168, %v1184
    %v1187 = vld [vmem:[#allocation2 + $0x4] sm:$0x3]
    %1188 = vmatprep.subr.bf16.mxu0 0
    %1189 = vmatpush1.bf16.msra.mxu0 0
    %1190 = vmatprep.subr.bf16.mxu0 0
    %1191 = vmatpush1.bf16.msra.mxu0 0
    %1192 = vmatprep.subr.bf16.mxu0 0
    %1193 = vmatpush1.bf16.msra.mxu0 0
    %1194 = vmatprep.subr.bf16.mxu0 0
    %1195 = vmatpush1.bf16.msra.mxu0 0
    %1196 = vmatprep.subr.bf16.mxu0 0
    %1197 = vmatpush1.bf16.msra.mxu0 0
    %1198 = vmatprep.subr.bf16.mxu0 0
    %1199 = vmatpush1.bf16.msra.mxu0 0
    %1200 = vmatprep.subr.bf16.mxu0 0
    %1201 = vmatpush1.bf16.msra.mxu0 %v802
    %1202 = vmatprep.subr.bf16.mxu0 0
    %1203 = vmatpush1.bf16.msra.mxu0 %v801
    %1204 = vmatprep.subr.bf16.mxu0 0
    %1205 = vmatpush2.bf16.msra.mxu0 0
    %1206 = vmatprep.subr.bf16.mxu0 0
    %1207 = vmatpush2.bf16.msra.mxu0 0
    %1208 = vmatprep.subr.bf16.mxu0 0
    %1209 = vmatpush2.bf16.msra.mxu0 0
    %1210 = vmatprep.subr.bf16.mxu0 0
    %1211 = vmatpush2.bf16.msra.mxu0 0
    %1212 = vmatprep.subr.bf16.mxu0 0
    %1213 = vmatpush2.bf16.msra.mxu0 0
    %1214 = vmatprep.subr.bf16.mxu0 0
    %1215 = vmatpush2.bf16.msra.mxu0 0
    %1216 = vmatprep.subr.bf16.mxu0 0
    %1217 = vmatpush2.bf16.msra.mxu0 0
    %1218 = vmatprep.subr.bf16.mxu0 0
    %1219 = vmatpush2.bf16.msra.mxu0 0
    %1220 = vmatprep.mubr.bf16.mxu0 0
    %1221 = vmatmul.mubr.bf16.gmra.mxu0 %v1122
    %v1222 = vpop.f32.mrf.mxu0
    %v1223 = vadd.f32 0.0, %v1222
    %v1224 = vpop.f32.mrf.mxu0
    %v1225 = vpop.f32.mrf.mxu0
    %v1226 = vpop.f32.mrf.mxu0
    %1227 = vdwg.mxu0
    %v1228 = vadd.f32 %v1187, %v1223
    %v1229 = vmul.f32 %v1228, 0.5
    %v1230 = vtanh.pop %v1229
    %v1231 = vadd.f32 %v1230, 1.0
    %v1232 = vmul.f32 %v1231, 0.5
    %v1233 = vtanh.pop %v1228
    %v1234 = vmul.f32 %v1232, %v1063
    %1236 = vrot.lane.b32.xlu0 %v1233, 64
    %v1237 = vpop.permute.xlu0 %1236
    %v1239 = vmul.f32 %v1232, %v1237
    %1241 = vrot.lane.b32.xlu0 %v1239, 32
    %v1242 = vpop.permute.xlu0 %1241
    %v1244 = vadd.f32 %v1234, %v1242
    %v1245 = vtanh.pop %v1244
    %1247 = vrot.lane.b32.xlu0 %v1245, 64
    %v1248 = vpop.permute.xlu0 %1247
    %v1250 = vmul.f32 %v1232, %v1248
    %v1251 = vpack.c.bf16 %v1250, %v1250
    %v1252 = vpack.c.bf16 %v1186, %v1186
    %1254 = vrot.lane.b32.xlu0 %v1252, 32
    %v1255 = vpop.permute.xlu0 %1254
    %v1257 = vsel %vm805, %v1255, 0
    %1259 = vmatprep.subr.bf16.mxu0 0
    %1260 = vmatpush1.bf16.msra.mxu0 0
    %1261 = vmatprep.subr.bf16.mxu0 0
    %1262 = vmatpush1.bf16.msra.mxu0 0
    %1263 = vmatprep.subr.bf16.mxu0 0
    %1264 = vmatpush1.bf16.msra.mxu0 0
    %1265 = vmatprep.subr.bf16.mxu0 0
    %1266 = vmatpush1.bf16.msra.mxu0 0
    %1267 = vmatprep.subr.bf16.mxu0 0
    %1268 = vmatpush1.bf16.msra.mxu0 0
    %1269 = vmatprep.subr.bf16.mxu0 0
    %1270 = vmatpush1.bf16.msra.mxu0 0
    %1271 = vmatprep.subr.bf16.mxu0 0
    %1272 = vmatpush1.bf16.msra.mxu0 %v882
    %1273 = vmatprep.subr.bf16.mxu0 0
    %1274 = vmatpush1.bf16.msra.mxu0 %v881
    %1275 = vmatprep.subr.bf16.mxu0 0
    %1276 = vmatpush2.bf16.msra.mxu0 0
    %1277 = vmatprep.subr.bf16.mxu0 0
    %1278 = vmatpush2.bf16.msra.mxu0 0
    %1279 = vmatprep.subr.bf16.mxu0 0
    %1280 = vmatpush2.bf16.msra.mxu0 0
    %1281 = vmatprep.subr.bf16.mxu0 0
    %1282 = vmatpush2.bf16.msra.mxu0 0
    %1283 = vmatprep.subr.bf16.mxu0 0
    %1284 = vmatpush2.bf16.msra.mxu0 0
    %1285 = vmatprep.subr.bf16.mxu0 0
    %1286 = vmatpush2.bf16.msra.mxu0 0
    %1287 = vmatprep.subr.bf16.mxu0 0
    %1288 = vmatpush2.bf16.msra.mxu0 0
    %1289 = vmatprep.subr.bf16.mxu0 0
    %1290 = vmatpush2.bf16.msra.mxu0 0
    %1291 = vmatprep.mubr.bf16.mxu0 0
    %1292 = vmatmul.mubr.bf16.gmra.mxu0 %v1257
    %v1293 = vpop.f32.mrf.mxu0
    %v1294 = vadd.f32 0.0, %v1293
    %v1295 = vpop.f32.mrf.mxu0
    %v1296 = vpop.f32.mrf.mxu0
    %v1297 = vpop.f32.mrf.mxu0
    %1298 = vdwg.mxu0
    %1300 = vrot.lane.b32.xlu0 %v1251, 32
    %v1301 = vpop.permute.xlu0 %1300
    %v1303 = vsel %vm805, %v1301, 0
    %1305 = vmatprep.subr.bf16.mxu0 0
    %1306 = vmatpush1.bf16.msra.mxu0 0
    %1307 = vmatprep.subr.bf16.mxu0 0
    %1308 = vmatpush1.bf16.msra.mxu0 0
    %1309 = vmatprep.subr.bf16.mxu0 0
    %1310 = vmatpush1.bf16.msra.mxu0 0
    %1311 = vmatprep.subr.bf16.mxu0 0
    %1312 = vmatpush1.bf16.msra.mxu0 0
    %1313 = vmatprep.subr.bf16.mxu0 0
    %1314 = vmatpush1.bf16.msra.mxu0 0
    %1315 = vmatprep.subr.bf16.mxu0 0
    %1316 = vmatpush1.bf16.msra.mxu0 0
    %1317 = vmatprep.subr.bf16.mxu0 0
    %1318 = vmatpush1.bf16.msra.mxu0 %v937
    %1319 = vmatprep.subr.bf16.mxu0 0
    %1320 = vmatpush1.bf16.msra.mxu0 %v936
    %1321 = vmatprep.subr.bf16.mxu0 0
    %1322 = vmatpush2.bf16.msra.mxu0 0
    %1323 = vmatprep.subr.bf16.mxu0 0
    %1324 = vmatpush2.bf16.msra.mxu0 0
    %1325 = vmatprep.subr.bf16.mxu0 0
    %1326 = vmatpush2.bf16.msra.mxu0 0
    %1327 = vmatprep.subr.bf16.mxu0 0
    %1328 = vmatpush2.bf16.msra.mxu0 0
    %1329 = vmatprep.subr.bf16.mxu0 0
    %1330 = vmatpush2.bf16.msra.mxu0 0
    %1331 = vmatprep.subr.bf16.mxu0 0
    %1332 = vmatpush2.bf16.msra.mxu0 0
    %1333 = vmatprep.subr.bf16.mxu0 0
    %1334 = vmatpush2.bf16.msra.mxu0 0
    %1335 = vmatprep.subr.bf16.mxu0 0
    %1336 = vmatpush2.bf16.msra.mxu0 0
    %1337 = vmatprep.mubr.bf16.mxu0 0
    %1338 = vmatmul.mubr.bf16.gmra.mxu0 %v1303
    %v1339 = vpop.f32.mrf.mxu0
    %v1340 = vadd.f32 %v1294, %v1339
    %v1341 = vpop.f32.mrf.mxu0
    %v1342 = vpop.f32.mrf.mxu0
    %v1343 = vpop.f32.mrf.mxu0
    %1344 = vdwg.mxu0
    %v1345 = vadd.f32 %v1340, %v790
    %v1346 = vmul.f32 %v1345, 0.5
    %v1347 = vtanh.pop %v1346
    %v1348 = vadd.f32 %v1347, 1.0
    %v1349 = vmul.f32 %v1348, 0.5
    %v1350 = vtanh.pop %v1345
    %v1351 = vmul.f32 %v1349, %v1180
    %1353 = vrot.lane.b32.xlu0 %v1350, 64
    %v1354 = vpop.permute.xlu0 %1353
    %v1356 = vmul.f32 %v1349, %v1354
    %1358 = vrot.lane.b32.xlu0 %v1356, 32
    %v1359 = vpop.permute.xlu0 %1358
    %v1361 = vadd.f32 %v1351, %v1359
    %v1362 = vtanh.pop %v1361
    %1364 = vrot.lane.b32.xlu0 %v1362, 64
    %v1365 = vpop.permute.xlu0 %1364
    %v1367 = vmul.f32 %v1349, %v1365
    %v1368 = vld [vmem:[#allocation2 + $0x6] sm:$0x3]
    %1369 = vmatprep.subr.bf16.mxu0 0
    %1370 = vmatpush1.bf16.msra.mxu0 0
    %1371 = vmatprep.subr.bf16.mxu0 0
    %1372 = vmatpush1.bf16.msra.mxu0 0
    %1373 = vmatprep.subr.bf16.mxu0 0
    %1374 = vmatpush1.bf16.msra.mxu0 0
    %1375 = vmatprep.subr.bf16.mxu0 0
    %1376 = vmatpush1.bf16.msra.mxu0 0
    %1377 = vmatprep.subr.bf16.mxu0 0
    %1378 = vmatpush1.bf16.msra.mxu0 0
    %1379 = vmatprep.subr.bf16.mxu0 0
    %1380 = vmatpush1.bf16.msra.mxu0 0
    %1381 = vmatprep.subr.bf16.mxu0 0
    %1382 = vmatpush1.bf16.msra.mxu0 %v802
    %1383 = vmatprep.subr.bf16.mxu0 0
    %1384 = vmatpush1.bf16.msra.mxu0 %v801
    %1385 = vmatprep.subr.bf16.mxu0 0
    %1386 = vmatpush2.bf16.msra.mxu0 0
    %1387 = vmatprep.subr.bf16.mxu0 0
    %1388 = vmatpush2.bf16.msra.mxu0 0
    %1389 = vmatprep.subr.bf16.mxu0 0
    %1390 = vmatpush2.bf16.msra.mxu0 0
    %1391 = vmatprep.subr.bf16.mxu0 0
    %1392 = vmatpush2.bf16.msra.mxu0 0
    %1393 = vmatprep.subr.bf16.mxu0 0
    %1394 = vmatpush2.bf16.msra.mxu0 0
    %1395 = vmatprep.subr.bf16.mxu0 0
    %1396 = vmatpush2.bf16.msra.mxu0 0
    %1397 = vmatprep.subr.bf16.mxu0 0
    %1398 = vmatpush2.bf16.msra.mxu0 0
    %1399 = vmatprep.subr.bf16.mxu0 0
    %1400 = vmatpush2.bf16.msra.mxu0 0
    %1401 = vmatprep.mubr.bf16.mxu0 0
    %1402 = vmatmul.mubr.bf16.gmra.mxu0 %v1303
    %v1403 = vpop.f32.mrf.mxu0
    %v1404 = vadd.f32 0.0, %v1403
    %v1405 = vpop.f32.mrf.mxu0
    %v1406 = vpop.f32.mrf.mxu0
    %v1407 = vpop.f32.mrf.mxu0
    %1408 = vdwg.mxu0
    %v1409 = vadd.f32 %v1368, %v1404
    %v1410 = vmul.f32 %v1409, 0.5
    %v1411 = vtanh.pop %v1410
    %v1412 = vadd.f32 %v1411, 1.0
    %v1413 = vmul.f32 %v1412, 0.5
    %v1414 = vtanh.pop %v1409
    %v1415 = vmul.f32 %v1413, %v1244
    %1417 = vrot.lane.b32.xlu0 %v1414, 64
    %v1418 = vpop.permute.xlu0 %1417
    %v1420 = vmul.f32 %v1413, %v1418
    %1422 = vrot.lane.b32.xlu0 %v1420, 32
    %v1423 = vpop.permute.xlu0 %1422
    %v1425 = vadd.f32 %v1415, %v1423
    %v1426 = vtanh.pop %v1425
    %1428 = vrot.lane.b32.xlu0 %v1426, 64
    %v1429 = vpop.permute.xlu0 %1428
    %v1431 = vmul.f32 %v1413, %v1429
    %v1432 = vpack.c.bf16 %v1431, %v1431
    %v1433 = vpack.c.bf16 %v1367, %v1367
    %1435 = vrot.lane.b32.xlu0 %v1433, 32
    %v1436 = vpop.permute.xlu0 %1435
    %v1438 = vsel %vm805, %v1436, 0
    %1440 = vmatprep.subr.bf16.mxu0 0
    %1441 = vmatpush1.bf16.msra.mxu0 0
    %1442 = vmatprep.subr.bf16.mxu0 0
    %1443 = vmatpush1.bf16.msra.mxu0 0
    %1444 = vmatprep.subr.bf16.mxu0 0
    %1445 = vmatpush1.bf16.msra.mxu0 0
    %1446 = vmatprep.subr.bf16.mxu0 0
    %1447 = vmatpush1.bf16.msra.mxu0 0
    %1448 = vmatprep.subr.bf16.mxu0 0
    %1449 = vmatpush1.bf16.msra.mxu0 0
    %1450 = vmatprep.subr.bf16.mxu0 0
    %1451 = vmatpush1.bf16.msra.mxu0 0
    %1452 = vmatprep.subr.bf16.mxu0 0
    %1453 = vmatpush1.bf16.msra.mxu0 %v882
    %1454 = vmatprep.subr.bf16.mxu0 0
    %1455 = vmatpush1.bf16.msra.mxu0 %v881
    %1456 = vmatprep.subr.bf16.mxu0 0
    %1457 = vmatpush2.bf16.msra.mxu0 0
    %1458 = vmatprep.subr.bf16.mxu0 0
    %1459 = vmatpush2.bf16.msra.mxu0 0
    %1460 = vmatprep.subr.bf16.mxu0 0
    %1461 = vmatpush2.bf16.msra.mxu0 0
    %1462 = vmatprep.subr.bf16.mxu0 0
    %1463 = vmatpush2.bf16.msra.mxu0 0
    %1464 = vmatprep.subr.bf16.mxu0 0
    %1465 = vmatpush2.bf16.msra.mxu0 0
    %1466 = vmatprep.subr.bf16.mxu0 0
    %1467 = vmatpush2.bf16.msra.mxu0 0
    %1468 = vmatprep.subr.bf16.mxu0 0
    %1469 = vmatpush2.bf16.msra.mxu0 0
    %1470 = vmatprep.subr.bf16.mxu0 0
    %1471 = vmatpush2.bf16.msra.mxu0 0
    %1472 = vmatprep.mubr.bf16.mxu0 0
    %1473 = vmatmul.mubr.bf16.gmra.mxu0 %v1438
    %v1474 = vpop.f32.mrf.mxu0
    %v1475 = vadd.f32 0.0, %v1474
    %v1476 = vpop.f32.mrf.mxu0
    %v1477 = vpop.f32.mrf.mxu0
    %v1478 = vpop.f32.mrf.mxu0
    %1479 = vdwg.mxu0
    %1481 = vrot.lane.b32.xlu0 %v1432, 32
    %v1482 = vpop.permute.xlu0 %1481
    %v1484 = vsel %vm805, %v1482, 0
    %1486 = vmatprep.subr.bf16.mxu0 0
    %1487 = vmatpush1.bf16.msra.mxu0 0
    %1488 = vmatprep.subr.bf16.mxu0 0
    %1489 = vmatpush1.bf16.msra.mxu0 0
    %1490 = vmatprep.subr.bf16.mxu0 0
    %1491 = vmatpush1.bf16.msra.mxu0 0
    %1492 = vmatprep.subr.bf16.mxu0 0
    %1493 = vmatpush1.bf16.msra.mxu0 0
    %1494 = vmatprep.subr.bf16.mxu0 0
    %1495 = vmatpush1.bf16.msra.mxu0 0
    %1496 = vmatprep.subr.bf16.mxu0 0
    %1497 = vmatpush1.bf16.msra.mxu0 0
    %1498 = vmatprep.subr.bf16.mxu0 0
    %1499 = vmatpush1.bf16.msra.mxu0 %v937
    %1500 = vmatprep.subr.bf16.mxu0 0
    %1501 = vmatpush1.bf16.msra.mxu0 %v936
    %1502 = vmatprep.subr.bf16.mxu0 0
    %1503 = vmatpush2.bf16.msra.mxu0 0
    %1504 = vmatprep.subr.bf16.mxu0 0
    %1505 = vmatpush2.bf16.msra.mxu0 0
    %1506 = vmatprep.subr.bf16.mxu0 0
    %1507 = vmatpush2.bf16.msra.mxu0 0
    %1508 = vmatprep.subr.bf16.mxu0 0
    %1509 = vmatpush2.bf16.msra.mxu0 0
    %1510 = vmatprep.subr.bf16.mxu0 0
    %1511 = vmatpush2.bf16.msra.mxu0 0
    %1512 = vmatprep.subr.bf16.mxu0 0
    %1513 = vmatpush2.bf16.msra.mxu0 0
    %1514 = vmatprep.subr.bf16.mxu0 0
    %1515 = vmatpush2.bf16.msra.mxu0 0
    %1516 = vmatprep.subr.bf16.mxu0 0
    %1517 = vmatpush2.bf16.msra.mxu0 0
    %1518 = vmatprep.mubr.bf16.mxu0 0
    %1519 = vmatmul.mubr.bf16.gmra.mxu0 %v1484
    %v1520 = vpop.f32.mrf.mxu0
    %v1521 = vadd.f32 %v1475, %v1520
    %v1522 = vpop.f32.mrf.mxu0
    %v1523 = vpop.f32.mrf.mxu0
    %v1524 = vpop.f32.mrf.mxu0
    %1525 = vdwg.mxu0
    %v1526 = vadd.f32 %v1521, %v790
    %v1527 = vmul.f32 %v1526, 0.5
    %v1528 = vtanh.pop %v1527
    %v1529 = vadd.f32 %v1528, 1.0
    %v1530 = vmul.f32 %v1529, 0.5
    %v1531 = vtanh.pop %v1526
    %v1532 = vmul.f32 %v1530, %v1361
    %1534 = vrot.lane.b32.xlu0 %v1531, 64
    %v1535 = vpop.permute.xlu0 %1534
    %v1537 = vmul.f32 %v1530, %v1535
    %1539 = vrot.lane.b32.xlu0 %v1537, 32
    %v1540 = vpop.permute.xlu0 %1539
    %v1542 = vadd.f32 %v1532, %v1540
    %v1543 = vtanh.pop %v1542
    %1545 = vrot.lane.b32.xlu0 %v1543, 64
    %v1546 = vpop.permute.xlu0 %1545
    %v1548 = vmul.f32 %v1530, %v1546
    %v1549 = vld [vmem:[%s11] sm:$0xf]
    %v1550 = vld [vmem:[%s11 + $0x4] sm:$0xf]
    %v1551 = vld [vmem:[%s11 + $0x8] sm:$0xf]
    %v1552 = vld [vmem:[%s11 + $0xc] sm:$0xf]
    %v1553 = vpack.c.bf16 %v1548, %v1548
    %v1554 = vld [vmem:[%s12] sm:$0x1]
    %v1556 = vlaneseq
    %v1557 = vshrl.u32 %v1556, 7
    %v1558 = vsub.s32 0, %v1557
    %v1559 = vrot.slane %v1554, %v1558
    %1562 = vrot.lane.b32.xlu0 %v1553, 32
    %v1563 = vpop.permute.xlu0 %1562
    %v1568 = vunpack.c.l.b16 %v1549
    %v1569 = vunpack.c.l.b16 %v1550
    %v1570 = vunpack.c.l.b16 %v1551
    %v1571 = vunpack.c.l.b16 %v1552
    %v1572 = vpack.c.b16 %v1569, %v1568
    %v1573 = vpack.c.b16 %v1571, %v1570
    %v1577 = vsel %vm805, %v1563, 0
    %1579 = vmatprep.subr.bf16.mxu0 0
    %1580 = vmatpush1.bf16.msra.mxu0 0
    %1581 = vmatprep.subr.bf16.mxu0 0
    %1582 = vmatpush1.bf16.msra.mxu0 0
    %1583 = vmatprep.subr.bf16.mxu0 0
    %1584 = vmatpush1.bf16.msra.mxu0 0
    %1585 = vmatprep.subr.bf16.mxu0 0
    %1586 = vmatpush1.bf16.msra.mxu0 0
    %1587 = vmatprep.subr.bf16.mxu0 0
    %1588 = vmatpush1.bf16.msra.mxu0 0
    %1589 = vmatprep.subr.bf16.mxu0 0
    %1590 = vmatpush1.bf16.msra.mxu0 0
    %1591 = vmatprep.subr.bf16.mxu0 0
    %1592 = vmatpush1.bf16.msra.mxu0 %v1573
    %1593 = vmatprep.subr.bf16.mxu0 0
    %1594 = vmatpush1.bf16.msra.mxu0 %v1572
    %1595 = vmatprep.subr.bf16.mxu0 0
    %1596 = vmatpush2.bf16.msra.mxu0 0
    %1597 = vmatprep.subr.bf16.mxu0 0
    %1598 = vmatpush2.bf16.msra.mxu0 0
    %1599 = vmatprep.subr.bf16.mxu0 0
    %1600 = vmatpush2.bf16.msra.mxu0 0
    %1601 = vmatprep.subr.bf16.mxu0 0
    %1602 = vmatpush2.bf16.msra.mxu0 0
    %1603 = vmatprep.subr.bf16.mxu0 0
    %1604 = vmatpush2.bf16.msra.mxu0 0
    %1605 = vmatprep.subr.bf16.mxu0 0
    %1606 = vmatpush2.bf16.msra.mxu0 0
    %1607 = vmatprep.subr.bf16.mxu0 0
    %1608 = vmatpush2.bf16.msra.mxu0 0
    %1609 = vmatprep.subr.bf16.mxu0 0
    %1610 = vmatpush2.bf16.msra.mxu0 0
    %1611 = vmatprep.mubr.bf16.mxu0 0
    %1612 = vmatmul.mubr.bf16.gmra.mxu0 %v1577
    %v1613 = vpop.f32.mrf.mxu0
    %v1614 = vadd.f32 %v1559, %v1613
    %v1615 = vpop.f32.mrf.mxu0
    %v1616 = vpop.f32.mrf.mxu0
    %v1617 = vpop.f32.mrf.mxu0
    %1618 = vdwg.mxu0
    %v1619 = vmax.f32 %v1614, 0.0
    %v1620 = vld [vmem:[%s13] sm:$0xf]
    %v1621 = vld [vmem:[%s13 + $0x4] sm:$0xf]
    %v1622 = vld [vmem:[%s13 + $0x8] sm:$0xf]
    %v1623 = vld [vmem:[%s13 + $0xc] sm:$0xf]
    %v1624 = vpack.c.bf16 %v1619, %v1619
    %v1625 = vld [vmem:[%s14] sm:$0x1]
    %v1627 = vlaneseq
    %v1628 = vshrl.u32 %v1627, 7
    %v1629 = vsub.s32 0, %v1628
    %v1630 = vrot.slane %v1625, %v1629
    %v1636 = vunpack.c.l.b16 %v1620
    %v1637 = vunpack.c.l.b16 %v1621
    %v1638 = vunpack.c.l.b16 %v1622
    %v1639 = vunpack.c.l.b16 %v1623
    %v1640 = vpack.c.b16 %v1637, %v1636
    %v1641 = vpack.c.b16 %v1639, %v1638
    %v1645 = vsel %vm805, %v1624, 0
    %1647 = vmatprep.subr.bf16.mxu0 0
    %1648 = vmatpush1.bf16.msra.mxu0 0
    %1649 = vmatprep.subr.bf16.mxu0 0
    %1650 = vmatpush1.bf16.msra.mxu0 0
    %1651 = vmatprep.subr.bf16.mxu0 0
    %1652 = vmatpush1.bf16.msra.mxu0 0
    %1653 = vmatprep.subr.bf16.mxu0 0
    %1654 = vmatpush1.bf16.msra.mxu0 0
    %1655 = vmatprep.subr.bf16.mxu0 0
    %1656 = vmatpush1.bf16.msra.mxu0 0
    %1657 = vmatprep.subr.bf16.mxu0 0
    %1658 = vmatpush1.bf16.msra.mxu0 0
    %1659 = vmatprep.subr.bf16.mxu0 0
    %1660 = vmatpush1.bf16.msra.mxu0 %v1641
    %1661 = vmatprep.subr.bf16.mxu0 0
    %1662 = vmatpush1.bf16.msra.mxu0 %v1640
    %1663 = vmatprep.subr.bf16.mxu0 0
    %1664 = vmatpush2.bf16.msra.mxu0 0
    %1665 = vmatprep.subr.bf16.mxu0 0
    %1666 = vmatpush2.bf16.msra.mxu0 0
    %1667 = vmatprep.subr.bf16.mxu0 0
    %1668 = vmatpush2.bf16.msra.mxu0 0
    %1669 = vmatprep.subr.bf16.mxu0 0
    %1670 = vmatpush2.bf16.msra.mxu0 0
    %1671 = vmatprep.subr.bf16.mxu0 0
    %1672 = vmatpush2.bf16.msra.mxu0 0
    %1673 = vmatprep.subr.bf16.mxu0 0
    %1674 = vmatpush2.bf16.msra.mxu0 0
    %1675 = vmatprep.subr.bf16.mxu0 0
    %1676 = vmatpush2.bf16.msra.mxu0 0
    %1677 = vmatprep.subr.bf16.mxu0 0
    %1678 = vmatpush2.bf16.msra.mxu0 0
    %1679 = vmatprep.mubr.bf16.mxu0 0
    %1680 = vmatmul.mubr.bf16.gmra.mxu0 %v1645
    %v1681 = vpop.f32.mrf.mxu0
    %v1682 = vadd.f32 %v1630, %v1681
    %v1683 = vpop.f32.mrf.mxu0
    %v1684 = vpop.f32.mrf.mxu0
    %v1685 = vpop.f32.mrf.mxu0
    %1686 = vdwg.mxu0
    %vm1687 = vcmask 17408
    %1688 = vst.msk [vmem:[#allocation14] sm:$0x3] %vm1687, %v1682
    // Predicated region
    $region86: #{tpu_custom_call.1} parent=1 // pred_check
      _
    $region87: #{tpu_custom_call.1} parent=1 // pred_check_branch
      %1690 = sbr.rel (0) target = $region89
    $region88: #{tpu_custom_call.1} parent=1 // pred_region
      %s1692 = ssub.s32 32, 32
      %1693 = vsyncadd [#allocation5], %s1692
      %s1695 = sshll.u32 [#allocation14], 4
      %s1696 = int_to_ptr.vmem [resolvable:$true] %s1695
      %1698 = dma.vmem_to_hbm [thread:$0]  %s1696, 32, %s15, [#allocation5]
    $region89: #{tpu_custom_call.1} parent=1 // pred_fallthru
      _
    // Predicated region
    $region90: #{tpu_custom_call.1} parent=1 // pred_check
      _
    $region91: #{tpu_custom_call.1} parent=1 // pred_check_branch
      %1700 = sbr.rel (0) target = $region93
    $region92: #{tpu_custom_call.1} parent=1 // pred_region
      %1701 = dma.done [#allocation5], 32
    $region93: #{tpu_custom_call.1} parent=1 // pred_fallthru
      _
    %1702 = vsyncpa [#allocation4], 1
    %1703 = vsyncpa [#allocation7], 1
    %1704 = vsyncpa [#allocation10], 1
    %1705 = vsyncpa [#allocation13], 1
    %1706 = vsyncpa [#allocation5], 1

</llo_original>
